<compile_context>
chip_gen: v5e
topology: v5e:2x2
jax: 0.10.0
libtpu: 0.0.40
codegen_flags: <defaults>
</compile_context>

<pallas_src>
import numpy as np

import jax
import jax.numpy as jnp
from jax import lax
from jax.experimental import pallas as pl
from jax.experimental.pallas import tpu as pltpu


def _make_kernel(R2, W, W2, co_t):
    def kernel(x_ref, w_ref, g_ref, b_ref, out_ref):
        # x_ref  : (1, C, H+2, W)          row-padded input (VMEM)
        # w_ref  : (2, 2, 3, co_t, C)      row-collapsed conv weights (VMEM)
        # g_ref  : (2, 3, R2*W, 2*R2*W2)   constant 0/1 column-upsample/scatter (VMEM)
        # b_ref  : (co_t, 1)               bias (VMEM)
        # out_ref: (1, co_t, 2*R2*W2)      2*R2 output rows, flattened lane-dense (VMEM)
        r = pl.program_id(2)
        row0 = r * R2

        # The R2 + 2 padded-input rows this chunk needs (1-row halo each side).
        rows = [x_ref[0, :, row0 + t, :] for t in range(R2 + 2)]            # (C, W) each
        # Three overlapping row-bands (original rows i-1, i, i+1 for the chunk),
        # flattened over (row-in-chunk, col) along lanes -> MXU-friendly RHS.
        bands = [jnp.concatenate(rows[m:m + R2], axis=1) for m in range(3)]  # (C, R2*W)

        acc = jnp.zeros((co_t, 2 * R2 * W2), dtype=jnp.float32)
        for p in range(2):              # output-row parity (even / odd output rows)
            for a in range(2):          # collapsed row tap
                band = bands[p + a]
                for kw in range(3):     # conv column tap
                    s = jnp.dot(w_ref[p, a, kw], band,
                                preferred_element_type=jnp.float32)          # (co_t, R2*W)
                    acc = acc + jnp.dot(s, g_ref[p, kw],
                                        preferred_element_type=jnp.float32)  # (co_t, 2*R2*W2)
        acc = acc + b_ref[...]          # (co_t, 1) broadcast over lanes
        out_ref[0, :, :] = acc.astype(out_ref.dtype)

    return kernel


def upsample_forward(x, w, b):
    """x: (N, C, H, W), w: (Cout, C, 3, 3), b: (Cout,) -> (N, Cout, 2H, 2W)."""
    N, C, H, W = x.shape
    Cout = w.shape[0]
    assert w.shape == (Cout, C, 3, 3) and b.shape == (Cout,)
    H2, W2 = 2 * H, 2 * W

    # --- static tiling choices -------------------------------------------------
    R2 = max(1, min(H, max(1, 128 // W)))   # original rows per chunk (~128-lane matmuls)
    while H % R2:
        R2 -= 1
    if (2 * R2 * W2) % 128 != 0:            # keep the output block lane-aligned
        R2 = H                              # fall back: one chunk == full flat dim
    co_t = Cout if Cout <= 256 else (256 if Cout % 256 == 0 else Cout)
    # TODO(synk): for very large C*H*W, additionally tile channels / rows with a halo
    # and set vmem_limit_bytes per-generation (v7x 64 MiB, v5e 16 MiB scoped default).

    # --- tiny parameter preprocessing (plain JAX / numpy) ----------------------
    # Row collapse: output row 2i+p uses 2 original-row taps a:
    #   p=0: a=0 <- kh0 (row i-1),     a=1 <- kh1+kh2 (row i)
    #   p=1: a=0 <- kh0+kh1 (row i),   a=1 <- kh2     (row i+1)
    R = np.array([[[1, 0, 0], [0, 1, 1]],
                  [[1, 1, 0], [0, 0, 1]]], dtype=np.float32)                 # (p, a, kh)
    w_row = jnp.einsum('pau,ocuv->pavoc', R, w.astype(jnp.float32))          # (2,2,3,Cout,C)

    # Column upsample + column tap kw + zero pad as a 0/1 matrix:
    # output column `col` reads original column (col+kw-1)//2 iff 1 <= col+kw <= W2.
    E = np.zeros((3, W, W2), dtype=np.float32)
    for kw in range(3):
        for col in range(W2):
            s = col + kw
            if 1 <= s <= W2:
                E[kw, (s - 1) // 2, col] = 1.0
    # Chunk version that also scatters chunk-row k to flat output row 2k+p.
    G2 = np.zeros((2, 3, R2 * W, 2 * R2 * W2), dtype=np.float32)
    for p in range(2):
        for kw in range(3):
            for k in range(R2):
                G2[p, kw, k * W:(k + 1) * W,
                   (2 * k + p) * W2:(2 * k + p + 1) * W2] = E[kw]
    g2 = jnp.asarray(G2)

    xr = jnp.pad(x, ((0, 0), (0, 0), (1, 1), (0, 0)))                        # (N, C, H+2, W)
    b2 = b.astype(jnp.float32).reshape(Cout, 1)

    grid = (N, Cout // co_t, H // R2)
    kernel = _make_kernel(R2, W, W2, co_t)

    flops = 2 * N * Cout * H * W * (12 * C + 24 * R2 * W2)
    bytes_accessed = 4 * (xr.size + w_row.size + g2.size + b2.size + N * Cout * H2 * W2)

    out_flat = pl.pallas_call(
        kernel,
        out_shape=jax.ShapeDtypeStruct((N, Cout, H2 * W2), x.dtype),
        grid=grid,
        in_specs=[
            pl.BlockSpec((1, C, H + 2, W), lambda n, co, r: (n, 0, 0, 0)),
            pl.BlockSpec((2, 2, 3, co_t, C), lambda n, co, r: (0, 0, 0, co, 0)),
            pl.BlockSpec((2, 3, R2 * W, 2 * R2 * W2), lambda n, co, r: (0, 0, 0, 0)),
            pl.BlockSpec((co_t, 1), lambda n, co, r: (co, 0)),
        ],
        out_specs=pl.BlockSpec((1, co_t, 2 * R2 * W2), lambda n, co, r: (n, co, r)),
        compiler_params=pltpu.CompilerParams(
            dimension_semantics=("parallel", "parallel", "parallel")),
        cost_estimate=pl.CostEstimate(flops=flops, transcendentals=0,
                                      bytes_accessed=bytes_accessed),
    )(xr, w_row, g2, b2)

    return out_flat.reshape(N, Cout, H2, W2)


if __name__ == "__main__":
    key = jax.random.PRNGKey(0)
    kx, kw_, kb = jax.random.split(key, 3)

    N, C, H, W = 2, 4, 16, 16
    Cout = C  # out_channels defaults to channels

    # Small-integer test data: every product and partial sum is exactly representable,
    # so the check is insensitive to the MXU's f32 accumulation mode.
    x = jax.random.randint(kx, (N, C, H, W), -3, 4).astype(jnp.float32)
    w = jax.random.randint(kw_, (Cout, C, 3, 3), -2, 3).astype(jnp.float32)
    b = jax.random.randint(kb, (Cout,), -2, 3).astype(jnp.float32)

    out = jax.block_until_ready(upsample_forward(x, w, b))

    # Reference (plain JAX): nearest-2x upsample + 3x3 SAME conv + bias.
    xu = jnp.repeat(jnp.repeat(x, 2, axis=2), 2, axis=3)
    ref = lax.conv_general_dilated(
        xu, w, window_strides=(1, 1), padding="SAME",
        dimension_numbers=("NCHW", "OIHW", "NCHW"),
    ) + b[None, :, None, None]

    assert out.shape == (N, Cout, 2 * H, 2 * W), out.shape
    max_err = float(jnp.max(jnp.abs(out - ref)))
    assert jnp.allclose(out, ref, atol=1e-4, rtol=1e-4), max_err
    print("KERNEL_OK")
</pallas_src>

<mosaic_0001>
module attributes {stable_mosaic.version = 11 : i64} {
  func.func @kernel(%arg0: i32, %arg1: i32, %arg2: i32, %arg3: memref<1x4x18x16xf32, #tpu.memory_space<vmem>>, %arg4: memref<2x2x3x4x4xf32, #tpu.memory_space<vmem>>, %arg5: memref<2x3x128x512xf32, #tpu.memory_space<vmem>>, %arg6: memref<4x1xf32, #tpu.memory_space<vmem>>, %arg7: memref<1x4x512xf32, #tpu.memory_space<vmem>>) attributes {dimension_semantics = [#tpu.dimension_semantics<parallel>, #tpu.dimension_semantics<parallel>, #tpu.dimension_semantics<parallel>], iteration_bounds = array<i64: 2, 1, 2>, scalar_prefetch = 0 : i64, scratch_operands = 0 : i64, tpu.core_type = #tpu.core_type<tc>, window_params = [{transform_indices = @transform_0, window_bounds = array<i64: 1, 4, 18, 16>}, {transform_indices = @transform_1, window_bounds = array<i64: 2, 2, 3, 4, 4>}, {pipeline_mode = #tpu.pipeline_mode<synchronous>, transform_indices = @transform_2, window_bounds = array<i64: 2, 3, 128, 512>}, {transform_indices = @transform_3, window_bounds = array<i64: 4, 1>}, {transform_indices = @transform_4, window_bounds = array<i64: 1, 4, 512>}]} {
    %c8_i32 = arith.constant 8 : i32
    %0 = arith.muli %arg2, %c8_i32 : i32
    %c0_i32 = arith.constant 0 : i32
    %1 = arith.addi %0, %c0_i32 : i32
    %c0 = arith.constant 0 : index
    %c0_0 = arith.constant 0 : index
    %2 = arith.index_cast %1 : i32 to index
    %c0_1 = arith.constant 0 : index
    %3 = vector.load %arg3[%c0, %c0_0, %2, %c0_1] : memref<1x4x18x16xf32, #tpu.memory_space<vmem>>, vector<1x4x1x16xf32>
    %4 = vector.shape_cast %3 : vector<1x4x1x16xf32> to vector<4x16xf32>
    %c1_i32 = arith.constant 1 : i32
    %5 = arith.addi %0, %c1_i32 : i32
    %c0_2 = arith.constant 0 : index
    %c0_3 = arith.constant 0 : index
    %6 = arith.index_cast %5 : i32 to index
    %c0_4 = arith.constant 0 : index
    %7 = vector.load %arg3[%c0_2, %c0_3, %6, %c0_4] : memref<1x4x18x16xf32, #tpu.memory_space<vmem>>, vector<1x4x1x16xf32>
    %8 = vector.shape_cast %7 : vector<1x4x1x16xf32> to vector<4x16xf32>
    %c2_i32 = arith.constant 2 : i32
    %9 = arith.addi %0, %c2_i32 : i32
    %c0_5 = arith.constant 0 : index
    %c0_6 = arith.constant 0 : index
    %10 = arith.index_cast %9 : i32 to index
    %c0_7 = arith.constant 0 : index
    %11 = vector.load %arg3[%c0_5, %c0_6, %10, %c0_7] : memref<1x4x18x16xf32, #tpu.memory_space<vmem>>, vector<1x4x1x16xf32>
    %12 = vector.shape_cast %11 : vector<1x4x1x16xf32> to vector<4x16xf32>
    %c3_i32 = arith.constant 3 : i32
    %13 = arith.addi %0, %c3_i32 : i32
    %c0_8 = arith.constant 0 : index
    %c0_9 = arith.constant 0 : index
    %14 = arith.index_cast %13 : i32 to index
    %c0_10 = arith.constant 0 : index
    %15 = vector.load %arg3[%c0_8, %c0_9, %14, %c0_10] : memref<1x4x18x16xf32, #tpu.memory_space<vmem>>, vector<1x4x1x16xf32>
    %16 = vector.shape_cast %15 : vector<1x4x1x16xf32> to vector<4x16xf32>
    %c4_i32 = arith.constant 4 : i32
    %17 = arith.addi %0, %c4_i32 : i32
    %c0_11 = arith.constant 0 : index
    %c0_12 = arith.constant 0 : index
    %18 = arith.index_cast %17 : i32 to index
    %c0_13 = arith.constant 0 : index
    %19 = vector.load %arg3[%c0_11, %c0_12, %18, %c0_13] : memref<1x4x18x16xf32, #tpu.memory_space<vmem>>, vector<1x4x1x16xf32>
    %20 = vector.shape_cast %19 : vector<1x4x1x16xf32> to vector<4x16xf32>
    %c5_i32 = arith.constant 5 : i32
    %21 = arith.addi %0, %c5_i32 : i32
    %c0_14 = arith.constant 0 : index
    %c0_15 = arith.constant 0 : index
    %22 = arith.index_cast %21 : i32 to index
    %c0_16 = arith.constant 0 : index
    %23 = vector.load %arg3[%c0_14, %c0_15, %22, %c0_16] : memref<1x4x18x16xf32, #tpu.memory_space<vmem>>, vector<1x4x1x16xf32>
    %24 = vector.shape_cast %23 : vector<1x4x1x16xf32> to vector<4x16xf32>
    %c6_i32 = arith.constant 6 : i32
    %25 = arith.addi %0, %c6_i32 : i32
    %c0_17 = arith.constant 0 : index
    %c0_18 = arith.constant 0 : index
    %26 = arith.index_cast %25 : i32 to index
    %c0_19 = arith.constant 0 : index
    %27 = vector.load %arg3[%c0_17, %c0_18, %26, %c0_19] : memref<1x4x18x16xf32, #tpu.memory_space<vmem>>, vector<1x4x1x16xf32>
    %28 = vector.shape_cast %27 : vector<1x4x1x16xf32> to vector<4x16xf32>
    %c7_i32 = arith.constant 7 : i32
    %29 = arith.addi %0, %c7_i32 : i32
    %c0_20 = arith.constant 0 : index
    %c0_21 = arith.constant 0 : index
    %30 = arith.index_cast %29 : i32 to index
    %c0_22 = arith.constant 0 : index
    %31 = vector.load %arg3[%c0_20, %c0_21, %30, %c0_22] : memref<1x4x18x16xf32, #tpu.memory_space<vmem>>, vector<1x4x1x16xf32>
    %32 = vector.shape_cast %31 : vector<1x4x1x16xf32> to vector<4x16xf32>
    %c8_i32_23 = arith.constant 8 : i32
    %33 = arith.addi %0, %c8_i32_23 : i32
    %c0_24 = arith.constant 0 : index
    %c0_25 = arith.constant 0 : index
    %34 = arith.index_cast %33 : i32 to index
    %c0_26 = arith.constant 0 : index
    %35 = vector.load %arg3[%c0_24, %c0_25, %34, %c0_26] : memref<1x4x18x16xf32, #tpu.memory_space<vmem>>, vector<1x4x1x16xf32>
    %36 = vector.shape_cast %35 : vector<1x4x1x16xf32> to vector<4x16xf32>
    %c9_i32 = arith.constant 9 : i32
    %37 = arith.addi %0, %c9_i32 : i32
    %c0_27 = arith.constant 0 : index
    %c0_28 = arith.constant 0 : index
    %38 = arith.index_cast %37 : i32 to index
    %c0_29 = arith.constant 0 : index
    %39 = vector.load %arg3[%c0_27, %c0_28, %38, %c0_29] : memref<1x4x18x16xf32, #tpu.memory_space<vmem>>, vector<1x4x1x16xf32>
    %40 = vector.shape_cast %39 : vector<1x4x1x16xf32> to vector<4x16xf32>
    %41 = tpu.concatenate %4, %8, %12, %16, %20, %24, %28, %32 in 1 : vector<4x16xf32>, vector<4x16xf32>, vector<4x16xf32>, vector<4x16xf32>, vector<4x16xf32>, vector<4x16xf32>, vector<4x16xf32>, vector<4x16xf32> -> vector<4x128xf32>
    %42 = tpu.concatenate %8, %12, %16, %20, %24, %28, %32, %36 in 1 : vector<4x16xf32>, vector<4x16xf32>, vector<4x16xf32>, vector<4x16xf32>, vector<4x16xf32>, vector<4x16xf32>, vector<4x16xf32>, vector<4x16xf32> -> vector<4x128xf32>
    %43 = tpu.concatenate %12, %16, %20, %24, %28, %32, %36, %40 in 1 : vector<4x16xf32>, vector<4x16xf32>, vector<4x16xf32>, vector<4x16xf32>, vector<4x16xf32>, vector<4x16xf32>, vector<4x16xf32>, vector<4x16xf32> -> vector<4x128xf32>
    %cst = arith.constant 0.000000e+00 : f32
    %44 = vector.broadcast %cst : f32 to vector<4x512xf32>
    %c0_30 = arith.constant 0 : index
    %c0_31 = arith.constant 0 : index
    %c0_32 = arith.constant 0 : index
    %c0_33 = arith.constant 0 : index
    %c0_34 = arith.constant 0 : index
    %45 = vector.load %arg4[%c0_30, %c0_31, %c0_32, %c0_33, %c0_34] : memref<2x2x3x4x4xf32, #tpu.memory_space<vmem>>, vector<1x1x1x4x4xf32>
    %46 = vector.shape_cast %45 : vector<1x1x1x4x4xf32> to vector<4x4xf32>
    %cst_35 = arith.constant dense<0.000000e+00> : vector<4x128xf32>
    %47 = tpu.matmul %46, %41, %cst_35 {dimension_numbers = #tpu.dot_dimension_numbers<[1], [0], [0], [1], [0, 0, 1, 1], [], []>} : vector<4x4xf32>, vector<4x128xf32>, vector<4x128xf32> -> vector<4x128xf32>
    %c0_36 = arith.constant 0 : index
    %c0_37 = arith.constant 0 : index
    %c0_38 = arith.constant 0 : index
    %c0_39 = arith.constant 0 : index
    %48 = vector.load %arg5[%c0_36, %c0_37, %c0_38, %c0_39] : memref<2x3x128x512xf32, #tpu.memory_space<vmem>>, vector<1x1x128x512xf32>
    %49 = vector.shape_cast %48 : vector<1x1x128x512xf32> to vector<128x512xf32>
    %cst_40 = arith.constant dense<0.000000e+00> : vector<4x512xf32>
    %50 = tpu.matmul %47, %49, %cst_40 {dimension_numbers = #tpu.dot_dimension_numbers<[1], [0], [0], [1], [0, 0, 1, 1], [], []>} : vector<4x128xf32>, vector<128x512xf32>, vector<4x512xf32> -> vector<4x512xf32>
    %51 = arith.addf %44, %50 : vector<4x512xf32>
    %c0_41 = arith.constant 0 : index
    %c0_42 = arith.constant 0 : index
    %c1 = arith.constant 1 : index
    %c0_43 = arith.constant 0 : index
    %c0_44 = arith.constant 0 : index
    %52 = vector.load %arg4[%c0_41, %c0_42, %c1, %c0_43, %c0_44] : memref<2x2x3x4x4xf32, #tpu.memory_space<vmem>>, vector<1x1x1x4x4xf32>
    %53 = vector.shape_cast %52 : vector<1x1x1x4x4xf32> to vector<4x4xf32>
    %cst_45 = arith.constant dense<0.000000e+00> : vector<4x128xf32>
    %54 = tpu.matmul %53, %41, %cst_45 {dimension_numbers = #tpu.dot_dimension_numbers<[1], [0], [0], [1], [0, 0, 1, 1], [], []>} : vector<4x4xf32>, vector<4x128xf32>, vector<4x128xf32> -> vector<4x128xf32>
    %c0_46 = arith.constant 0 : index
    %c1_47 = arith.constant 1 : index
    %c0_48 = arith.constant 0 : index
    %c0_49 = arith.constant 0 : index
    %55 = vector.load %arg5[%c0_46, %c1_47, %c0_48, %c0_49] : memref<2x3x128x512xf32, #tpu.memory_space<vmem>>, vector<1x1x128x512xf32>
    %56 = vector.shape_cast %55 : vector<1x1x128x512xf32> to vector<128x512xf32>
    %cst_50 = arith.constant dense<0.000000e+00> : vector<4x512xf32>
    %57 = tpu.matmul %54, %56, %cst_50 {dimension_numbers = #tpu.dot_dimension_numbers<[1], [0], [0], [1], [0, 0, 1, 1], [], []>} : vector<4x128xf32>, vector<128x512xf32>, vector<4x512xf32> -> vector<4x512xf32>
    %58 = arith.addf %51, %57 : vector<4x512xf32>
    %c0_51 = arith.constant 0 : index
    %c0_52 = arith.constant 0 : index
    %c2 = arith.constant 2 : index
    %c0_53 = arith.constant 0 : index
    %c0_54 = arith.constant 0 : index
    %59 = vector.load %arg4[%c0_51, %c0_52, %c2, %c0_53, %c0_54] : memref<2x2x3x4x4xf32, #tpu.memory_space<vmem>>, vector<1x1x1x4x4xf32>
    %60 = vector.shape_cast %59 : vector<1x1x1x4x4xf32> to vector<4x4xf32>
    %cst_55 = arith.constant dense<0.000000e+00> : vector<4x128xf32>
    %61 = tpu.matmul %60, %41, %cst_55 {dimension_numbers = #tpu.dot_dimension_numbers<[1], [0], [0], [1], [0, 0, 1, 1], [], []>} : vector<4x4xf32>, vector<4x128xf32>, vector<4x128xf32> -> vector<4x128xf32>
    %c0_56 = arith.constant 0 : index
    %c2_57 = arith.constant 2 : index
    %c0_58 = arith.constant 0 : index
    %c0_59 = arith.constant 0 : index
    %62 = vector.load %arg5[%c0_56, %c2_57, %c0_58, %c0_59] : memref<2x3x128x512xf32, #tpu.memory_space<vmem>>, vector<1x1x128x512xf32>
    %63 = vector.shape_cast %62 : vector<1x1x128x512xf32> to vector<128x512xf32>
    %cst_60 = arith.constant dense<0.000000e+00> : vector<4x512xf32>
    %64 = tpu.matmul %61, %63, %cst_60 {dimension_numbers = #tpu.dot_dimension_numbers<[1], [0], [0], [1], [0, 0, 1, 1], [], []>} : vector<4x128xf32>, vector<128x512xf32>, vector<4x512xf32> -> vector<4x512xf32>
    %65 = arith.addf %58, %64 : vector<4x512xf32>
    %c0_61 = arith.constant 0 : index
    %c1_62 = arith.constant 1 : index
    %c0_63 = arith.constant 0 : index
    %c0_64 = arith.constant 0 : index
    %c0_65 = arith.constant 0 : index
    %66 = vector.load %arg4[%c0_61, %c1_62, %c0_63, %c0_64, %c0_65] : memref<2x2x3x4x4xf32, #tpu.memory_space<vmem>>, vector<1x1x1x4x4xf32>
    %67 = vector.shape_cast %66 : vector<1x1x1x4x4xf32> to vector<4x4xf32>
    %cst_66 = arith.constant dense<0.000000e+00> : vector<4x128xf32>
    %68 = tpu.matmul %67, %42, %cst_66 {dimension_numbers = #tpu.dot_dimension_numbers<[1], [0], [0], [1], [0, 0, 1, 1], [], []>} : vector<4x4xf32>, vector<4x128xf32>, vector<4x128xf32> -> vector<4x128xf32>
    %c0_67 = arith.constant 0 : index
    %c0_68 = arith.constant 0 : index
    %c0_69 = arith.constant 0 : index
    %c0_70 = arith.constant 0 : index
    %69 = vector.load %arg5[%c0_67, %c0_68, %c0_69, %c0_70] : memref<2x3x128x512xf32, #tpu.memory_space<vmem>>, vector<1x1x128x512xf32>
    %70 = vector.shape_cast %69 : vector<1x1x128x512xf32> to vector<128x512xf32>
    %cst_71 = arith.constant dense<0.000000e+00> : vector<4x512xf32>
    %71 = tpu.matmul %68, %70, %cst_71 {dimension_numbers = #tpu.dot_dimension_numbers<[1], [0], [0], [1], [0, 0, 1, 1], [], []>} : vector<4x128xf32>, vector<128x512xf32>, vector<4x512xf32> -> vector<4x512xf32>
    %72 = arith.addf %65, %71 : vector<4x512xf32>
    %c0_72 = arith.constant 0 : index
    %c1_73 = arith.constant 1 : index
    %c1_74 = arith.constant 1 : index
    %c0_75 = arith.constant 0 : index
    %c0_76 = arith.constant 0 : index
    %73 = vector.load %arg4[%c0_72, %c1_73, %c1_74, %c0_75, %c0_76] : memref<2x2x3x4x4xf32, #tpu.memory_space<vmem>>, vector<1x1x1x4x4xf32>
    %74 = vector.shape_cast %73 : vector<1x1x1x4x4xf32> to vector<4x4xf32>
    %cst_77 = arith.constant dense<0.000000e+00> : vector<4x128xf32>
    %75 = tpu.matmul %74, %42, %cst_77 {dimension_numbers = #tpu.dot_dimension_numbers<[1], [0], [0], [1], [0, 0, 1, 1], [], []>} : vector<4x4xf32>, vector<4x128xf32>, vector<4x128xf32> -> vector<4x128xf32>
    %c0_78 = arith.constant 0 : index
    %c1_79 = arith.constant 1 : index
    %c0_80 = arith.constant 0 : index
    %c0_81 = arith.constant 0 : index
    %76 = vector.load %arg5[%c0_78, %c1_79, %c0_80, %c0_81] : memref<2x3x128x512xf32, #tpu.memory_space<vmem>>, vector<1x1x128x512xf32>
    %77 = vector.shape_cast %76 : vector<1x1x128x512xf32> to vector<128x512xf32>
    %cst_82 = arith.constant dense<0.000000e+00> : vector<4x512xf32>
    %78 = tpu.matmul %75, %77, %cst_82 {dimension_numbers = #tpu.dot_dimension_numbers<[1], [0], [0], [1], [0, 0, 1, 1], [], []>} : vector<4x128xf32>, vector<128x512xf32>, vector<4x512xf32> -> vector<4x512xf32>
    %79 = arith.addf %72, %78 : vector<4x512xf32>
    %c0_83 = arith.constant 0 : index
    %c1_84 = arith.constant 1 : index
    %c2_85 = arith.constant 2 : index
    %c0_86 = arith.constant 0 : index
    %c0_87 = arith.constant 0 : index
    %80 = vector.load %arg4[%c0_83, %c1_84, %c2_85, %c0_86, %c0_87] : memref<2x2x3x4x4xf32, #tpu.memory_space<vmem>>, vector<1x1x1x4x4xf32>
    %81 = vector.shape_cast %80 : vector<1x1x1x4x4xf32> to vector<4x4xf32>
    %cst_88 = arith.constant dense<0.000000e+00> : vector<4x128xf32>
    %82 = tpu.matmul %81, %42, %cst_88 {dimension_numbers = #tpu.dot_dimension_numbers<[1], [0], [0], [1], [0, 0, 1, 1], [], []>} : vector<4x4xf32>, vector<4x128xf32>, vector<4x128xf32> -> vector<4x128xf32>
    %c0_89 = arith.constant 0 : index
    %c2_90 = arith.constant 2 : index
    %c0_91 = arith.constant 0 : index
    %c0_92 = arith.constant 0 : index
    %83 = vector.load %arg5[%c0_89, %c2_90, %c0_91, %c0_92] : memref<2x3x128x512xf32, #tpu.memory_space<vmem>>, vector<1x1x128x512xf32>
    %84 = vector.shape_cast %83 : vector<1x1x128x512xf32> to vector<128x512xf32>
    %cst_93 = arith.constant dense<0.000000e+00> : vector<4x512xf32>
    %85 = tpu.matmul %82, %84, %cst_93 {dimension_numbers = #tpu.dot_dimension_numbers<[1], [0], [0], [1], [0, 0, 1, 1], [], []>} : vector<4x128xf32>, vector<128x512xf32>, vector<4x512xf32> -> vector<4x512xf32>
    %86 = arith.addf %79, %85 : vector<4x512xf32>
    %c1_94 = arith.constant 1 : index
    %c0_95 = arith.constant 0 : index
    %c0_96 = arith.constant 0 : index
    %c0_97 = arith.constant 0 : index
    %c0_98 = arith.constant 0 : index
    %87 = vector.load %arg4[%c1_94, %c0_95, %c0_96, %c0_97, %c0_98] : memref<2x2x3x4x4xf32, #tpu.memory_space<vmem>>, vector<1x1x1x4x4xf32>
    %88 = vector.shape_cast %87 : vector<1x1x1x4x4xf32> to vector<4x4xf32>
    %cst_99 = arith.constant dense<0.000000e+00> : vector<4x128xf32>
    %89 = tpu.matmul %88, %42, %cst_99 {dimension_numbers = #tpu.dot_dimension_numbers<[1], [0], [0], [1], [0, 0, 1, 1], [], []>} : vector<4x4xf32>, vector<4x128xf32>, vector<4x128xf32> -> vector<4x128xf32>
    %c1_100 = arith.constant 1 : index
    %c0_101 = arith.constant 0 : index
    %c0_102 = arith.constant 0 : index
    %c0_103 = arith.constant 0 : index
    %90 = vector.load %arg5[%c1_100, %c0_101, %c0_102, %c0_103] : memref<2x3x128x512xf32, #tpu.memory_space<vmem>>, vector<1x1x128x512xf32>
    %91 = vector.shape_cast %90 : vector<1x1x128x512xf32> to vector<128x512xf32>
    %cst_104 = arith.constant dense<0.000000e+00> : vector<4x512xf32>
    %92 = tpu.matmul %89, %91, %cst_104 {dimension_numbers = #tpu.dot_dimension_numbers<[1], [0], [0], [1], [0, 0, 1, 1], [], []>} : vector<4x128xf32>, vector<128x512xf32>, vector<4x512xf32> -> vector<4x512xf32>
    %93 = arith.addf %86, %92 : vector<4x512xf32>
    %c1_105 = arith.constant 1 : index
    %c0_106 = arith.constant 0 : index
    %c1_107 = arith.constant 1 : index
    %c0_108 = arith.constant 0 : index
    %c0_109 = arith.constant 0 : index
    %94 = vector.load %arg4[%c1_105, %c0_106, %c1_107, %c0_108, %c0_109] : memref<2x2x3x4x4xf32, #tpu.memory_space<vmem>>, vector<1x1x1x4x4xf32>
    %95 = vector.shape_cast %94 : vector<1x1x1x4x4xf32> to vector<4x4xf32>
    %cst_110 = arith.constant dense<0.000000e+00> : vector<4x128xf32>
    %96 = tpu.matmul %95, %42, %cst_110 {dimension_numbers = #tpu.dot_dimension_numbers<[1], [0], [0], [1], [0, 0, 1, 1], [], []>} : vector<4x4xf32>, vector<4x128xf32>, vector<4x128xf32> -> vector<4x128xf32>
    %c1_111 = arith.constant 1 : index
    %c1_112 = arith.constant 1 : index
    %c0_113 = arith.constant 0 : index
    %c0_114 = arith.constant 0 : index
    %97 = vector.load %arg5[%c1_111, %c1_112, %c0_113, %c0_114] : memref<2x3x128x512xf32, #tpu.memory_space<vmem>>, vector<1x1x128x512xf32>
    %98 = vector.shape_cast %97 : vector<1x1x128x512xf32> to vector<128x512xf32>
    %cst_115 = arith.constant dense<0.000000e+00> : vector<4x512xf32>
    %99 = tpu.matmul %96, %98, %cst_115 {dimension_numbers = #tpu.dot_dimension_numbers<[1], [0], [0], [1], [0, 0, 1, 1], [], []>} : vector<4x128xf32>, vector<128x512xf32>, vector<4x512xf32> -> vector<4x512xf32>
    %100 = arith.addf %93, %99 : vector<4x512xf32>
    %c1_116 = arith.constant 1 : index
    %c0_117 = arith.constant 0 : index
    %c2_118 = arith.constant 2 : index
    %c0_119 = arith.constant 0 : index
    %c0_120 = arith.constant 0 : index
    %101 = vector.load %arg4[%c1_116, %c0_117, %c2_118, %c0_119, %c0_120] : memref<2x2x3x4x4xf32, #tpu.memory_space<vmem>>, vector<1x1x1x4x4xf32>
    %102 = vector.shape_cast %101 : vector<1x1x1x4x4xf32> to vector<4x4xf32>
    %cst_121 = arith.constant dense<0.000000e+00> : vector<4x128xf32>
    %103 = tpu.matmul %102, %42, %cst_121 {dimension_numbers = #tpu.dot_dimension_numbers<[1], [0], [0], [1], [0, 0, 1, 1], [], []>} : vector<4x4xf32>, vector<4x128xf32>, vector<4x128xf32> -> vector<4x128xf32>
    %c1_122 = arith.constant 1 : index
    %c2_123 = arith.constant 2 : index
    %c0_124 = arith.constant 0 : index
    %c0_125 = arith.constant 0 : index
    %104 = vector.load %arg5[%c1_122, %c2_123, %c0_124, %c0_125] : memref<2x3x128x512xf32, #tpu.memory_space<vmem>>, vector<1x1x128x512xf32>
    %105 = vector.shape_cast %104 : vector<1x1x128x512xf32> to vector<128x512xf32>
    %cst_126 = arith.constant dense<0.000000e+00> : vector<4x512xf32>
    %106 = tpu.matmul %103, %105, %cst_126 {dimension_numbers = #tpu.dot_dimension_numbers<[1], [0], [0], [1], [0, 0, 1, 1], [], []>} : vector<4x128xf32>, vector<128x512xf32>, vector<4x512xf32> -> vector<4x512xf32>
    %107 = arith.addf %100, %106 : vector<4x512xf32>
    %c1_127 = arith.constant 1 : index
    %c1_128 = arith.constant 1 : index
    %c0_129 = arith.constant 0 : index
    %c0_130 = arith.constant 0 : index
    %c0_131 = arith.constant 0 : index
    %108 = vector.load %arg4[%c1_127, %c1_128, %c0_129, %c0_130, %c0_131] : memref<2x2x3x4x4xf32, #tpu.memory_space<vmem>>, vector<1x1x1x4x4xf32>
    %109 = vector.shape_cast %108 : vector<1x1x1x4x4xf32> to vector<4x4xf32>
    %cst_132 = arith.constant dense<0.000000e+00> : vector<4x128xf32>
    %110 = tpu.matmul %109, %43, %cst_132 {dimension_numbers = #tpu.dot_dimension_numbers<[1], [0], [0], [1], [0, 0, 1, 1], [], []>} : vector<4x4xf32>, vector<4x128xf32>, vector<4x128xf32> -> vector<4x128xf32>
    %c1_133 = arith.constant 1 : index
    %c0_134 = arith.constant 0 : index
    %c0_135 = arith.constant 0 : index
    %c0_136 = arith.constant 0 : index
    %111 = vector.load %arg5[%c1_133, %c0_134, %c0_135, %c0_136] : memref<2x3x128x512xf32, #tpu.memory_space<vmem>>, vector<1x1x128x512xf32>
    %112 = vector.shape_cast %111 : vector<1x1x128x512xf32> to vector<128x512xf32>
    %cst_137 = arith.constant dense<0.000000e+00> : vector<4x512xf32>
    %113 = tpu.matmul %110, %112, %cst_137 {dimension_numbers = #tpu.dot_dimension_numbers<[1], [0], [0], [1], [0, 0, 1, 1], [], []>} : vector<4x128xf32>, vector<128x512xf32>, vector<4x512xf32> -> vector<4x512xf32>
    %114 = arith.addf %107, %113 : vector<4x512xf32>
    %c1_138 = arith.constant 1 : index
    %c1_139 = arith.constant 1 : index
    %c1_140 = arith.constant 1 : index
    %c0_141 = arith.constant 0 : index
    %c0_142 = arith.constant 0 : index
    %115 = vector.load %arg4[%c1_138, %c1_139, %c1_140, %c0_141, %c0_142] : memref<2x2x3x4x4xf32, #tpu.memory_space<vmem>>, vector<1x1x1x4x4xf32>
    %116 = vector.shape_cast %115 : vector<1x1x1x4x4xf32> to vector<4x4xf32>
    %cst_143 = arith.constant dense<0.000000e+00> : vector<4x128xf32>
    %117 = tpu.matmul %116, %43, %cst_143 {dimension_numbers = #tpu.dot_dimension_numbers<[1], [0], [0], [1], [0, 0, 1, 1], [], []>} : vector<4x4xf32>, vector<4x128xf32>, vector<4x128xf32> -> vector<4x128xf32>
    %c1_144 = arith.constant 1 : index
    %c1_145 = arith.constant 1 : index
    %c0_146 = arith.constant 0 : index
    %c0_147 = arith.constant 0 : index
    %118 = vector.load %arg5[%c1_144, %c1_145, %c0_146, %c0_147] : memref<2x3x128x512xf32, #tpu.memory_space<vmem>>, vector<1x1x128x512xf32>
    %119 = vector.shape_cast %118 : vector<1x1x128x512xf32> to vector<128x512xf32>
    %cst_148 = arith.constant dense<0.000000e+00> : vector<4x512xf32>
    %120 = tpu.matmul %117, %119, %cst_148 {dimension_numbers = #tpu.dot_dimension_numbers<[1], [0], [0], [1], [0, 0, 1, 1], [], []>} : vector<4x128xf32>, vector<128x512xf32>, vector<4x512xf32> -> vector<4x512xf32>
    %121 = arith.addf %114, %120 : vector<4x512xf32>
    %c1_149 = arith.constant 1 : index
    %c1_150 = arith.constant 1 : index
    %c2_151 = arith.constant 2 : index
    %c0_152 = arith.constant 0 : index
    %c0_153 = arith.constant 0 : index
    %122 = vector.load %arg4[%c1_149, %c1_150, %c2_151, %c0_152, %c0_153] : memref<2x2x3x4x4xf32, #tpu.memory_space<vmem>>, vector<1x1x1x4x4xf32>
    %123 = vector.shape_cast %122 : vector<1x1x1x4x4xf32> to vector<4x4xf32>
    %cst_154 = arith.constant dense<0.000000e+00> : vector<4x128xf32>
    %124 = tpu.matmul %123, %43, %cst_154 {dimension_numbers = #tpu.dot_dimension_numbers<[1], [0], [0], [1], [0, 0, 1, 1], [], []>} : vector<4x4xf32>, vector<4x128xf32>, vector<4x128xf32> -> vector<4x128xf32>
    %c1_155 = arith.constant 1 : index
    %c2_156 = arith.constant 2 : index
    %c0_157 = arith.constant 0 : index
    %c0_158 = arith.constant 0 : index
    %125 = vector.load %arg5[%c1_155, %c2_156, %c0_157, %c0_158] : memref<2x3x128x512xf32, #tpu.memory_space<vmem>>, vector<1x1x128x512xf32>
    %126 = vector.shape_cast %125 : vector<1x1x128x512xf32> to vector<128x512xf32>
    %cst_159 = arith.constant dense<0.000000e+00> : vector<4x512xf32>
    %127 = tpu.matmul %124, %126, %cst_159 {dimension_numbers = #tpu.dot_dimension_numbers<[1], [0], [0], [1], [0, 0, 1, 1], [], []>} : vector<4x128xf32>, vector<128x512xf32>, vector<4x512xf32> -> vector<4x512xf32>
    %128 = arith.addf %121, %127 : vector<4x512xf32>
    %c0_160 = arith.constant 0 : index
    %c0_161 = arith.constant 0 : index
    %129 = vector.load %arg6[%c0_160, %c0_161] : memref<4x1xf32, #tpu.memory_space<vmem>>, vector<4x1xf32>
    %130 = vector.broadcast %129 : vector<4x1xf32> to vector<4x512xf32>
    %131 = arith.addf %128, %130 : vector<4x512xf32>
    %c0_162 = arith.constant 0 : index
    %c0_163 = arith.constant 0 : index
    %c0_164 = arith.constant 0 : index
    %132 = vector.load %arg7[%c0_162, %c0_163, %c0_164] : memref<1x4x512xf32, #tpu.memory_space<vmem>>, vector<1x4x512xf32>
    %133 = vector.shape_cast %132 : vector<1x4x512xf32> to vector<4x512xf32>
    %134 = vector.shape_cast %131 : vector<4x512xf32> to vector<1x4x512xf32>
    tpu.vector_store %arg7[%c0_162, %c0_163, %c0_164], %134 {strides = array<i32>} : memref<1x4x512xf32, #tpu.memory_space<vmem>>, vector<1x4x512xf32>,
    return
  }
  func.func @transform_0(%arg0: i32, %arg1: i32, %arg2: i32) -> (i32, i32, i32, i32) {
    %c0_i32 = arith.constant 0 : i32
    %c0_i32_0 = arith.constant 0 : i32
    %c0_i32_1 = arith.constant 0 : i32
    %c0_i32_2 = arith.constant 0 : i32
    return %arg0, %c0_i32, %c0_i32_0, %c0_i32_1 : i32, i32, i32, i32
  }
  func.func @transform_1(%arg0: i32, %arg1: i32, %arg2: i32) -> (i32, i32, i32, i32, i32) {
    %c0_i32 = arith.constant 0 : i32
    %c0_i32_0 = arith.constant 0 : i32
    %c0_i32_1 = arith.constant 0 : i32
    %c0_i32_2 = arith.constant 0 : i32
    %c0_i32_3 = arith.constant 0 : i32
    return %c0_i32, %c0_i32_0, %c0_i32_1, %arg1, %c0_i32_2 : i32, i32, i32, i32, i32
  }
  func.func @transform_2(%arg0: i32, %arg1: i32, %arg2: i32) -> (i32, i32, i32, i32) {
    %c0_i32 = arith.constant 0 : i32
    %c0_i32_0 = arith.constant 0 : i32
    %c0_i32_1 = arith.constant 0 : i32
    %c0_i32_2 = arith.constant 0 : i32
    %c0_i32_3 = arith.constant 0 : i32
    return %c0_i32, %c0_i32_0, %c0_i32_1, %c0_i32_2 : i32, i32, i32, i32
  }
  func.func @transform_3(%arg0: i32, %arg1: i32, %arg2: i32) -> (i32, i32) {
    %c0_i32 = arith.constant 0 : i32
    %c0_i32_0 = arith.constant 0 : i32
    return %arg1, %c0_i32 : i32, i32
  }
  func.func @transform_4(%arg0: i32, %arg1: i32, %arg2: i32) -> (i32, i32, i32) {
    %c0_i32 = arith.constant 0 : i32
    return %arg0, %arg1, %arg2 : i32, i32, i32
  }
}

</mosaic_0001>

<llo_original>
// kernel: tpu_custom_call.1
$region0: #{tpu_custom_call.1}
  #allocation0 [shape = 'u32[]', space=smem, size = 0x4, offset = 0x4, fixed_abs, tag = 'smem constant byte address 0x4 - core index']
  #allocation1 [shape = 'u32[72,128]{1,0:T(1,128)}', space=vmem, size = 0x9000, scoped, tag = 'internal scratch']
  %s0 = inlined_call_operand.vmem [shape: f32[2,4,18,16], index: 0, kind: input, shape index: {}]
  %s1 = inlined_call_operand.hbm [shape: f32[2,2,3,4,4], index: 1, kind: input, shape index: {}]
  %s2 = inlined_call_operand.hbm [shape: f32[2,3,128,512], index: 2, kind: input, shape index: {}]
  %s3 = inlined_call_operand.vmem [shape: f32[4,1], index: 3, kind: input, shape index: {}]
  %s4 = inlined_call_operand.hbm [shape: f32[2,4,1024], index: 4, kind: output, shape index: {}]
  %s5 = sld [smem:[#allocation0]]
  $region57: #{tpu_custom_call.1} parent=0
    _
  %s7 = ssub.s32 1, %s5
  %s8 = scalar_select 0, %s7, %s5
  $region1: #{tpu_custom_call.1} parent=0
    #allocation2 [shape = 'u8[24576]{0}', space=vmem, size = 0x6000, scoped, tag = 'input window, operand 1, single buffered']
    #allocation3 [shape = 's32[2]{0}', space=sflag, size = 0x8, scoped, tag = 'scoped memory for tpu_custom_call.1']
    #allocation4 [shape = 's32[2]{0}', space=sflag, size = 0x8, scoped, tag = 'scoped memory for tpu_custom_call.1']
    #allocation5 [shape = 'u8[1572864]{0}', space=vmem, size = 0x180000, scoped, tag = 'input window, operand 2, single buffered']
    #allocation6 [shape = 's32[1]{0}', space=sflag, size = 0x4, scoped, tag = 'scoped memory for tpu_custom_call.1']
    #allocation7 [shape = 'u8[16384]{0}', space=vmem, size = 0x4000, scoped, tag = 'output window, operand 0']
    %9 = vsyncpa [#allocation3], 0
    %10 = vsyncpa [#allocation6], 0
    %11 = vsyncpa [#allocation4], 0
    %s12 = scalar_lea.sflag [#allocation4], 1
    %13 = vsyncpa %s12, 0
    loop: start=0, step=1, limit=6
    $region2: #{tpu_custom_call.1} parent=1 // loop_pre_header
      _
    $region3: #{tpu_custom_call.1} parent=1 // loop_header
      %s15 = sphi 0, %s19
      %p16 = scmp.ge.s32.totalorder %s15, 6
      %s22 = sphi 0, %s41
      %s23 = sphi 0, %s37
      %s24 = sphi 0, %s33
      %s25 = sphi 0, %s22
      %s26 = sphi 0, %s23
      %s27 = sphi 0, %s24
      %s28 = sphi 0, %s25
      %s29 = sphi 0, %s26
      %s30 = sphi 0, %s27
      %s44 = sphi 0, %s46
      %s47 = sphi 0, %s44
      %s48 = sphi 0, %s47
      %s64 = sphi 0, %s48
      %s70 = sphi 0, %s72
      %s73 = sphi 0, %s70
      %s74 = sphi 0, %s73
      %s90 = sphi 0, %s74
      %s94 = sphi 0, %s94
      %s96 = sphi 0, %s94
      %s97 = sphi 0, %s96
      %s111 = sphi 0, %s97
      %s117 = sphi 0, %s119
      %s120 = sphi 0, %s117
      %s121 = sphi 0, %s120
      %s137 = sphi 0, %s121
      %s147 = sphi 0, %s149
      %s150 = sphi 0, %s147
      %s151 = sphi 0, %s150
      %s167 = sphi 0, %s151
    $region4: #{tpu_custom_call.1} parent=1 // loop_header_branch
      %18 = sbr.rel (%p16) target = $region8
    $region5: #{tpu_custom_call.1} parent=1 // loop_body
      %s20 = ssub.s32 %s15, 1
      %s21 = ssub.s32 %s15, 2
      %s31 = sadd.s32 1, %s24
      %p32 = scmp.ge.s32.totalorder %s31, 2
      %s33 = scalar_select %p32, 0, %s31
      %s34 = sadd.s32 1, %s23
      %s35 = scalar_select %p32, %s34, %s23
      %p36 = scmp.ge.s32.totalorder %s35, 1
      %s37 = scalar_select %p36, 0, %s35
      %s38 = sadd.s32 1, %s22
      %s39 = scalar_select %p36, %s38, %s22
      %p40 = scmp.ge.s32.totalorder %s39, 2
      %s41 = scalar_select %p40, 0, %s39
      %s42 = ssub.s32 %s22, %s41
      %p43 = scmp.eq.s32.totalorder %s42, 0
      %s45 = sadd.s32 %s44, 1
      %s46 = scalar_select %p43, %s44, %s45
      %p49 = pneg %p43
      %p50 = scmp.eq.s32.totalorder %s15, 3
      %p51 = por %p49, %p50
      %p52 = scmp.ne.s32.totalorder %s44, %s47
      %p53 = scmp.eq.s32.totalorder %s15, 0
      %p54 = por %p52, %p53
      %p55 = scmp.ne.s32.totalorder %s44, %s47
      %p56 = scmp.eq.s32.totalorder %s20, 3
      %p57 = por %p55, %p56
      %p58 = scmp.ne.s32.totalorder %s47, %s48
      %p59 = scmp.eq.s32.totalorder %s20, 0
      %p60 = por %p58, %p59
      %p61 = scmp.ne.s32.totalorder %s47, %s48
      %p62 = scmp.eq.s32.totalorder %s21, 3
      %p63 = por %p61, %p62
      %p65 = scmp.ne.s32.totalorder %s48, %s64
      %p66 = scmp.eq.s32.totalorder %s21, 0
      %p67 = por %p65, %p66
      %s68 = ssub.s32 %s23, %s37
      %p69 = scmp.eq.s32.totalorder %s68, 0
      %s71 = sadd.s32 %s70, 1
      %s72 = scalar_select %p69, %s70, %s71
      %p75 = pneg %p69
      %p76 = scmp.eq.s32.totalorder %s15, 3
      %p77 = por %p75, %p76
      %p78 = scmp.ne.s32.totalorder %s70, %s73
      %p79 = scmp.eq.s32.totalorder %s15, 0
      %p80 = por %p78, %p79
      %p81 = scmp.ne.s32.totalorder %s70, %s73
      %p82 = scmp.eq.s32.totalorder %s20, 3
      %p83 = por %p81, %p82
      %p84 = scmp.ne.s32.totalorder %s73, %s74
      %p85 = scmp.eq.s32.totalorder %s20, 0
      %p86 = por %p84, %p85
      %p87 = scmp.ne.s32.totalorder %s73, %s74
      %p88 = scmp.eq.s32.totalorder %s21, 3
      %p89 = por %p87, %p88
      %p91 = scmp.ne.s32.totalorder %s74, %s90
      %p92 = scmp.eq.s32.totalorder %s21, 0
      %p93 = por %p91, %p92
      %s95 = sadd.s32 %s94, 1
      %p98 = scmp.eq.s32.totalorder %s15, 3
      %p99 = scmp.ne.s32.totalorder %s94, %s96
      %p100 = scmp.eq.s32.totalorder %s15, 0
      %p101 = por %p99, %p100
      %p102 = scmp.ne.s32.totalorder %s94, %s96
      %p103 = scmp.eq.s32.totalorder %s20, 3
      %p104 = por %p102, %p103
      %p105 = scmp.ne.s32.totalorder %s96, %s97
      %p106 = scmp.eq.s32.totalorder %s20, 0
      %p107 = por %p105, %p106
      %p108 = scmp.ne.s32.totalorder %s96, %s97
      %p109 = scmp.eq.s32.totalorder %s21, 3
      %p110 = por %p108, %p109
      %p112 = scmp.ne.s32.totalorder %s97, %s111
      %p113 = scmp.eq.s32.totalorder %s21, 0
      %p114 = por %p112, %p113
      %s115 = ssub.s32 %s23, %s37
      %p116 = scmp.eq.s32.totalorder %s115, 0
      %s118 = sadd.s32 %s117, 1
      %s119 = scalar_select %p116, %s117, %s118
      %p122 = pneg %p116
      %p123 = scmp.eq.s32.totalorder %s15, 3
      %p124 = por %p122, %p123
      %p125 = scmp.ne.s32.totalorder %s117, %s120
      %p126 = scmp.eq.s32.totalorder %s15, 0
      %p127 = por %p125, %p126
      %p128 = scmp.ne.s32.totalorder %s117, %s120
      %p129 = scmp.eq.s32.totalorder %s20, 3
      %p130 = por %p128, %p129
      %p131 = scmp.ne.s32.totalorder %s120, %s121
      %p132 = scmp.eq.s32.totalorder %s20, 0
      %p133 = por %p131, %p132
      %p134 = scmp.ne.s32.totalorder %s120, %s121
      %p135 = scmp.eq.s32.totalorder %s21, 3
      %p136 = por %p134, %p135
      %p138 = scmp.ne.s32.totalorder %s121, %s137
      %p139 = scmp.eq.s32.totalorder %s21, 0
      %p140 = por %p138, %p139
      %s141 = ssub.s32 %s22, %s41
      %s142 = ssub.s32 %s23, %s37
      %s143 = sor.u32 %s141, %s142
      %s144 = ssub.s32 %s24, %s33
      %s145 = sor.u32 %s143, %s144
      %p146 = scmp.eq.s32.totalorder %s145, 0
      %s148 = sadd.s32 %s147, 1
      %s149 = scalar_select %p146, %s147, %s148
      %p152 = pneg %p146
      %p153 = scmp.eq.s32.totalorder %s15, 3
      %p154 = por %p152, %p153
      %p155 = scmp.ne.s32.totalorder %s147, %s150
      %p156 = scmp.eq.s32.totalorder %s15, 0
      %p157 = por %p155, %p156
      %p158 = scmp.ne.s32.totalorder %s147, %s150
      %p159 = scmp.eq.s32.totalorder %s20, 3
      %p160 = por %p158, %p159
      %p161 = scmp.ne.s32.totalorder %s150, %s151
      %p162 = scmp.eq.s32.totalorder %s20, 0
      %p163 = por %p161, %p162
      %p164 = scmp.ne.s32.totalorder %s150, %s151
      %p165 = scmp.eq.s32.totalorder %s21, 3
      %p166 = por %p164, %p165
      %p168 = scmp.ne.s32.totalorder %s151, %s167
      %p169 = scmp.eq.s32.totalorder %s21, 0
      %p170 = por %p168, %p169
      %p171 = scmp.le.s32.totalorder 1, %s15
      %p172 = scmp.lt.s32.totalorder %s15, 5
      %p173 = pnand %p171, %p172
      %p174 = pneg %p173
      // Predicated region
      $region9: #{tpu_custom_call.1} parent=5 // pred_check
        _
      $region10: #{tpu_custom_call.1} parent=5 // pred_check_branch
        %176 = sbr.rel (%p173) target = $region12
      $region11: #{tpu_custom_call.1} parent=5 // pred_region
        %s177 = ssub.s32 %s15, 1
        // Predicated region
        $region13: #{tpu_custom_call.1} parent=11 // pred_check
          %p178 = pneg %p86
        $region14: #{tpu_custom_call.1} parent=11 // pred_check_branch
          %180 = sbr.rel (%p178) target = $region16
        $region15: #{tpu_custom_call.1} parent=11 // pred_region
          %182 = vsyncadd [#allocation3], 0
          %s183 = smul.addr %s26, 4
          %s184 = scalar_lea.hbm %s1, %s183
          %s185 = sshll.u32 %s184, 4
          %s186 = int_to_ptr.hbm [resolvable:$true] %s185
          %s187 = sshll.u32 [#allocation2], 4
          %s188 = int_to_ptr.vmem [resolvable:$true] %s187
          %193 = dma.hbm_to_vmem [thread:$0]  %s186, 768, %s188, [#allocation3], 64, 64, 4
        $region16: #{tpu_custom_call.1} parent=11 // pred_fallthru
          _
        // Predicated region
        $region17: #{tpu_custom_call.1} parent=11 // pred_check
          %p194 = pneg %p107
        $region18: #{tpu_custom_call.1} parent=11 // pred_check_branch
          %196 = sbr.rel (%p194) target = $region20
        $region19: #{tpu_custom_call.1} parent=11 // pred_region
          %198 = vsyncadd [#allocation6], 0
          %s199 = sshll.u32 %s2, 4
          %s200 = int_to_ptr.hbm [resolvable:$true] %s199
          %s201 = sshll.u32 [#allocation5], 4
          %s202 = int_to_ptr.vmem [resolvable:$true] %s201
          %207 = dma.hbm_to_vmem [thread:$0]  %s200, 49152, %s202, [#allocation6], 512, 512, 32
        $region20: #{tpu_custom_call.1} parent=11 // pred_fallthru
          _
        // Predicated region
        $region21: #{tpu_custom_call.1} parent=11 // pred_check
          %p208 = pneg %p133
        $region22: #{tpu_custom_call.1} parent=11 // pred_check_branch
          %210 = sbr.rel (%p208) target = $region24
        $region23: #{tpu_custom_call.1} parent=11 // pred_region
          %p211 = scmp.lt.s32.totalorder %s26, 0
          %s212 = scalar_select %p211, %s26, 0
          %s213 = smul.addr %s212, 4
          %s214 = scalar_lea.vmem %s3, %s213
        $region24: #{tpu_custom_call.1} parent=11 // pred_fallthru
          _
      $region12: #{tpu_custom_call.1} parent=5 // pred_fallthru
        _
      %p215 = scmp.lt.s32.totalorder %s15, 4
      // Predicated region
      $region25: #{tpu_custom_call.1} parent=5 // pred_check
        %p216 = pneg %p215
      $region26: #{tpu_custom_call.1} parent=5 // pred_check_branch
        %218 = sbr.rel (%p216) target = $region28
      $region27: #{tpu_custom_call.1} parent=5 // pred_region
        // Predicated region
        $region29: #{tpu_custom_call.1} parent=27 // pred_check
          %p219 = pneg %p54
        $region30: #{tpu_custom_call.1} parent=27 // pred_check_branch
          %221 = sbr.rel (%p219) target = $region32
        $region31: #{tpu_custom_call.1} parent=27 // pred_region
          %p222 = scmp.lt.s32.totalorder %s22, 1
          %s223 = scalar_select %p222, %s22, 1
          %s224 = smul.addr %s223, 12
          %s225 = smul.addr %s224, 8
          %s226 = scalar_lea.vmem %s0, %s225
        $region32: #{tpu_custom_call.1} parent=27 // pred_fallthru
          _
      $region28: #{tpu_custom_call.1} parent=5 // pred_fallthru
        _
      %p227 = scmp.le.s32.totalorder 1, %s15
      %p228 = scmp.lt.s32.totalorder %s15, 5
      %p229 = pnand %p227, %p228
      %p230 = pneg %p229
      // Predicated region
      $region33: #{tpu_custom_call.1} parent=5 // pred_check
        _
      $region34: #{tpu_custom_call.1} parent=5 // pred_check_branch
        %232 = sbr.rel (%p229) target = $region36
      $region35: #{tpu_custom_call.1} parent=5 // pred_region
        %s233 = ssub.s32 %s15, 1
        // Predicated region
        $region37: #{tpu_custom_call.1} parent=35 // pred_check
          %p234 = pneg %p86
        $region38: #{tpu_custom_call.1} parent=35 // pred_check_branch
          %236 = sbr.rel (%p234) target = $region40
        $region39: #{tpu_custom_call.1} parent=35 // pred_region
          %238 = dma.done [#allocation3], 768
        $region40: #{tpu_custom_call.1} parent=35 // pred_fallthru
          _
        // Predicated region
        $region41: #{tpu_custom_call.1} parent=35 // pred_check
          %p239 = pneg %p107
        $region42: #{tpu_custom_call.1} parent=35 // pred_check_branch
          %241 = sbr.rel (%p239) target = $region44
        $region43: #{tpu_custom_call.1} parent=35 // pred_region
          %243 = dma.done [#allocation6], 49152
        $region44: #{tpu_custom_call.1} parent=35 // pred_fallthru
          _
        %p244 = scmp.lt.s32.totalorder %s25, 1
        %s245 = scalar_select %p244, %s25, 1
        %s246 = smul.addr %s245, 12
        %s247 = smul.addr %s246, 8
        %s248 = scalar_lea.vmem %s0, %s247
        %p249 = pneg %p60
        %p250 = pneg %p57
        %p251 = pneg %p86
        %p252 = pneg %p83
        %p253 = pneg %p107
        %p254 = pneg %p104
        %p255 = scmp.lt.s32.totalorder %s26, 0
        %s256 = scalar_select %p255, %s26, 0
        %s257 = smul.addr %s256, 4
        %s258 = scalar_lea.vmem %s3, %s257
        %p259 = pneg %p133
        %p260 = pneg %p130
        %p261 = pneg %p163
        %p262 = pneg %p160
        %s263 = sand.u32 %s150, 1
        %s264 = scalar_lea.sflag [#allocation4], %s263
        %s265 = sand.u32 %s150, 1
        %s266 = smul.addr %s265, 16
        %s267 = scalar_lea.vmem [#allocation7], %s266
        %p268 = scmp.lt.s32.totalorder %s25, 1
        %s269 = scalar_select %p268, %s25, 1
        %s270 = smul.addr %s269, 12
        %s271 = smul.addr %s270, 8
        %s272 = scalar_lea.vmem %s0, %s271
        %p273 = scmp.lt.s32.totalorder %s26, 0
        %s274 = scalar_select %p273, %s26, 0
        %s275 = smul.addr %s274, 4
        %s276 = scalar_lea.vmem %s3, %s275
        %s277 = smul.u32 4, %s27
        %s278 = smul.u32 %s27, 8
        %s279 = scalar_lea.vmem %s272, %s278
        %v280 = vld [vmem:[%s279] sm:$0x1]
        %v281 = vld [vmem:[%s279 + $0x18] sm:$0x1]
        %v282 = vld [vmem:[%s279 + $0x30] sm:$0x1]
        %v283 = vld [vmem:[%s279 + $0x48] sm:$0x1]
        %s284 = sadd.s32 %s278, 1
        %s285 = scalar_lea.vmem %s272, %s284
        %v286 = vld [vmem:[%s285] sm:$0x1]
        %v287 = vld [vmem:[%s285 + $0x18] sm:$0x1]
        %v288 = vld [vmem:[%s285 + $0x30] sm:$0x1]
        %v289 = vld [vmem:[%s285 + $0x48] sm:$0x1]
        %s290 = sadd.s32 %s278, 2
        %s291 = scalar_lea.vmem %s272, %s290
        %v292 = vld [vmem:[%s291] sm:$0x1]
        %v293 = vld [vmem:[%s291 + $0x18] sm:$0x1]
        %v294 = vld [vmem:[%s291 + $0x30] sm:$0x1]
        %v295 = vld [vmem:[%s291 + $0x48] sm:$0x1]
        %s296 = sadd.s32 %s278, 3
        %s297 = scalar_lea.vmem %s272, %s296
        %v298 = vld [vmem:[%s297] sm:$0x1]
        %v299 = vld [vmem:[%s297 + $0x18] sm:$0x1]
        %v300 = vld [vmem:[%s297 + $0x30] sm:$0x1]
        %v301 = vld [vmem:[%s297 + $0x48] sm:$0x1]
        %s302 = sadd.s32 %s278, 4
        %s303 = scalar_lea.vmem %s272, %s302
        %v304 = vld [vmem:[%s303] sm:$0x1]
        %v305 = vld [vmem:[%s303 + $0x18] sm:$0x1]
        %v306 = vld [vmem:[%s303 + $0x30] sm:$0x1]
        %v307 = vld [vmem:[%s303 + $0x48] sm:$0x1]
        %s308 = sadd.s32 %s278, 5
        %s309 = scalar_lea.vmem %s272, %s308
        %v310 = vld [vmem:[%s309] sm:$0x1]
        %v311 = vld [vmem:[%s309 + $0x18] sm:$0x1]
        %v312 = vld [vmem:[%s309 + $0x30] sm:$0x1]
        %v313 = vld [vmem:[%s309 + $0x48] sm:$0x1]
        %s314 = sadd.s32 %s278, 6
        %s315 = scalar_lea.vmem %s272, %s314
        %v316 = vld [vmem:[%s315] sm:$0x1]
        %v317 = vld [vmem:[%s315 + $0x18] sm:$0x1]
        %v318 = vld [vmem:[%s315 + $0x30] sm:$0x1]
        %v319 = vld [vmem:[%s315 + $0x48] sm:$0x1]
        %s320 = sadd.s32 %s278, 7
        %s321 = scalar_lea.vmem %s272, %s320
        %v322 = vld [vmem:[%s321] sm:$0x1]
        %v323 = vld [vmem:[%s321 + $0x18] sm:$0x1]
        %v324 = vld [vmem:[%s321 + $0x30] sm:$0x1]
        %v325 = vld [vmem:[%s321 + $0x48] sm:$0x1]
        %s326 = sadd.s32 %s278, 8
        %s327 = scalar_lea.vmem %s272, %s326
        %v328 = vld [vmem:[%s327] sm:$0x1]
        %v329 = vld [vmem:[%s327 + $0x18] sm:$0x1]
        %v330 = vld [vmem:[%s327 + $0x30] sm:$0x1]
        %v331 = vld [vmem:[%s327 + $0x48] sm:$0x1]
        %s332 = sadd.s32 %s278, 9
        %s333 = scalar_lea.vmem %s272, %s332
        %v334 = vld [vmem:[%s333] sm:$0x1]
        %v335 = vld [vmem:[%s333 + $0x18] sm:$0x1]
        %v336 = vld [vmem:[%s333 + $0x30] sm:$0x1]
        %v337 = vld [vmem:[%s333 + $0x48] sm:$0x1]
        %v342 = vrot.slane %v281, 7
        %vm343 = vcmask 1041409
        %v344 = vsel %vm343, %v342, %v280
        %v345 = vrot.slane %v282, 6
        %vm346 = vcmask 1042434
        %v347 = vsel %vm346, %v345, %v344
        %v348 = vrot.slane %v283, 5
        %vm349 = vcmask 1043459
        %v350 = vsel %vm349, %v348, %v347
        %v356 = vrot.slane %v287, 7
        %v357 = vsel %vm343, %v356, %v286
        %v358 = vrot.slane %v288, 6
        %v359 = vsel %vm346, %v358, %v357
        %v360 = vrot.slane %v289, 5
        %v361 = vsel %vm349, %v360, %v359
        %362 = vrot.lane.b32.xlu0 %v361, 16
        %v363 = vpop.permute.xlu0 %362
        %v369 = vrot.slane %v293, 7
        %v370 = vsel %vm343, %v369, %v292
        %v371 = vrot.slane %v294, 6
        %v372 = vsel %vm346, %v371, %v370
        %v373 = vrot.slane %v295, 5
        %v374 = vsel %vm349, %v373, %v372
        %375 = vrot.lane.b32.xlu0 %v374, 32
        %v376 = vpop.permute.xlu0 %375
        %v382 = vrot.slane %v299, 7
        %v383 = vsel %vm343, %v382, %v298
        %v384 = vrot.slane %v300, 6
        %v385 = vsel %vm346, %v384, %v383
        %v386 = vrot.slane %v301, 5
        %v387 = vsel %vm349, %v386, %v385
        %388 = vrot.lane.b32.xlu0 %v387, 48
        %v389 = vpop.permute.xlu0 %388
        %v395 = vrot.slane %v305, 7
        %v396 = vsel %vm343, %v395, %v304
        %v397 = vrot.slane %v306, 6
        %v398 = vsel %vm346, %v397, %v396
        %v399 = vrot.slane %v307, 5
        %v400 = vsel %vm349, %v399, %v398
        %401 = vrot.lane.b32.xlu0 %v400, 64
        %v402 = vpop.permute.xlu0 %401
        %v408 = vrot.slane %v311, 7
        %v409 = vsel %vm343, %v408, %v310
        %v410 = vrot.slane %v312, 6
        %v411 = vsel %vm346, %v410, %v409
        %v412 = vrot.slane %v313, 5
        %v413 = vsel %vm349, %v412, %v411
        %414 = vrot.lane.b32.xlu0 %v413, 80
        %v415 = vpop.permute.xlu0 %414
        %v421 = vrot.slane %v317, 7
        %v422 = vsel %vm343, %v421, %v316
        %v423 = vrot.slane %v318, 6
        %v424 = vsel %vm346, %v423, %v422
        %v425 = vrot.slane %v319, 5
        %v426 = vsel %vm349, %v425, %v424
        %427 = vrot.lane.b32.xlu0 %v426, 96
        %v428 = vpop.permute.xlu0 %427
        %v434 = vrot.slane %v323, 7
        %v435 = vsel %vm343, %v434, %v322
        %v436 = vrot.slane %v324, 6
        %v437 = vsel %vm346, %v436, %v435
        %v438 = vrot.slane %v325, 5
        %v439 = vsel %vm349, %v438, %v437
        %440 = vrot.lane.b32.xlu0 %v439, 112
        %v441 = vpop.permute.xlu0 %440
        %vm443 = vcmask 130048
        %v444 = vsel %vm443, %v350, %v363
        %vm445 = vcmask 261120
        %v446 = vsel %vm445, %v444, %v376
        %vm447 = vcmask 392192
        %v448 = vsel %vm447, %v446, %v389
        %vm449 = vcmask 523264
        %v450 = vsel %vm449, %v448, %v402
        %vm451 = vcmask 654336
        %v452 = vsel %vm451, %v450, %v415
        %vm453 = vcmask 785408
        %v454 = vsel %vm453, %v452, %v428
        %vm455 = vcmask 916480
        %v456 = vsel %vm455, %v454, %v441
        %458 = vrot.lane.b32.xlu0 %v374, 16
        %v459 = vpop.permute.xlu0 %458
        %461 = vrot.lane.b32.xlu0 %v387, 32
        %v462 = vpop.permute.xlu0 %461
        %464 = vrot.lane.b32.xlu0 %v400, 48
        %v465 = vpop.permute.xlu0 %464
        %467 = vrot.lane.b32.xlu0 %v413, 64
        %v468 = vpop.permute.xlu0 %467
        %470 = vrot.lane.b32.xlu0 %v426, 80
        %v471 = vpop.permute.xlu0 %470
        %473 = vrot.lane.b32.xlu0 %v439, 96
        %v474 = vpop.permute.xlu0 %473
        %v480 = vrot.slane %v329, 7
        %v481 = vsel %vm343, %v480, %v328
        %v482 = vrot.slane %v330, 6
        %v483 = vsel %vm346, %v482, %v481
        %v484 = vrot.slane %v331, 5
        %v485 = vsel %vm349, %v484, %v483
        %486 = vrot.lane.b32.xlu0 %v485, 112
        %v487 = vpop.permute.xlu0 %486
        %v489 = vsel %vm443, %v361, %v459
        %v490 = vsel %vm445, %v489, %v462
        %v491 = vsel %vm447, %v490, %v465
        %v492 = vsel %vm449, %v491, %v468
        %v493 = vsel %vm451, %v492, %v471
        %v494 = vsel %vm453, %v493, %v474
        %v495 = vsel %vm455, %v494, %v487
        %497 = vrot.lane.b32.xlu0 %v387, 16
        %v498 = vpop.permute.xlu0 %497
        %500 = vrot.lane.b32.xlu0 %v400, 32
        %v501 = vpop.permute.xlu0 %500
        %503 = vrot.lane.b32.xlu0 %v413, 48
        %v504 = vpop.permute.xlu0 %503
        %506 = vrot.lane.b32.xlu0 %v426, 64
        %v507 = vpop.permute.xlu0 %506
        %509 = vrot.lane.b32.xlu0 %v439, 80
        %v510 = vpop.permute.xlu0 %509
        %512 = vrot.lane.b32.xlu0 %v485, 96
        %v513 = vpop.permute.xlu0 %512
        %v519 = vrot.slane %v335, 7
        %v520 = vsel %vm343, %v519, %v334
        %v521 = vrot.slane %v336, 6
        %v522 = vsel %vm346, %v521, %v520
        %v523 = vrot.slane %v337, 5
        %v524 = vsel %vm349, %v523, %v522
        %525 = vrot.lane.b32.xlu0 %v524, 112
        %v526 = vpop.permute.xlu0 %525
        %v528 = vsel %vm443, %v374, %v498
        %v529 = vsel %vm445, %v528, %v501
        %v530 = vsel %vm447, %v529, %v504
        %v531 = vsel %vm449, %v530, %v507
        %v532 = vsel %vm451, %v531, %v510
        %v533 = vsel %vm453, %v532, %v513
        %v534 = vsel %vm455, %v533, %v526
        %v535 = vld [vmem:[#allocation2] sm:$0xf]
        %vm536 = vcmask 31744
        %v538 = vsel %vm536, %v535, 0
        %vm540 = vcmask 1043456
        %v542 = vsel %vm540, %v456, 0
        %544 = vmatpush.msra.mxu0 0.0
        %545 = vmatpush.msra.mxu0 0.0
        %546 = vmatpush.msra.mxu0 0.0
        %547 = vmatpush.msra.mxu0 0.0
        %548 = vmatpush.msra.mxu0 0.0
        %549 = vmatpush.msra.mxu0 0.0
        %550 = vmatpush.msra.mxu0 0.0
        %551 = vmatpush.msra.mxu0 0.0
        %552 = vmatpush.msra.mxu0 0.0
        %553 = vmatpush.msra.mxu0 0.0
        %554 = vmatpush.msra.mxu0 0.0
        %555 = vmatpush.msra.mxu0 0.0
        %556 = vmatpush.msra.mxu0 0.0
        %557 = vmatpush.msra.mxu0 0.0
        %558 = vmatpush.msra.mxu0 0.0
        %559 = vmatpush.msra.mxu0 %v542
        %560 = vmatmul.f32.gmra.mxu0 %v538
        %v561 = vpop.f32.mrf.mxu0
        %v562 = vadd.f32 0.0, %v561
        %563 = vdwg.mxu0
        %v564 = vld [vmem:[#allocation5] sm:$0xff]
        %v565 = vld [vmem:[#allocation5 + $0x8] sm:$0xff]
        %v566 = vld [vmem:[#allocation5 + $0x10] sm:$0xff]
        %v567 = vld [vmem:[#allocation5 + $0x18] sm:$0xff]
        %v568 = vld [vmem:[#allocation5 + $0x20] sm:$0xff]
        %v569 = vld [vmem:[#allocation5 + $0x28] sm:$0xff]
        %v570 = vld [vmem:[#allocation5 + $0x30] sm:$0xff]
        %v571 = vld [vmem:[#allocation5 + $0x38] sm:$0xff]
        %v572 = vld [vmem:[#allocation5 + $0x40] sm:$0xff]
        %v573 = vld [vmem:[#allocation5 + $0x48] sm:$0xff]
        %v574 = vld [vmem:[#allocation5 + $0x50] sm:$0xff]
        %v575 = vld [vmem:[#allocation5 + $0x58] sm:$0xff]
        %v576 = vld [vmem:[#allocation5 + $0x60] sm:$0xff]
        %v577 = vld [vmem:[#allocation5 + $0x68] sm:$0xff]
        %v578 = vld [vmem:[#allocation5 + $0x70] sm:$0xff]
        %v579 = vld [vmem:[#allocation5 + $0x78] sm:$0xff]
        %v580 = vld [vmem:[#allocation5 + $0x80] sm:$0xff]
        %v581 = vld [vmem:[#allocation5 + $0x88] sm:$0xff]
        %v582 = vld [vmem:[#allocation5 + $0x90] sm:$0xff]
        %v583 = vld [vmem:[#allocation5 + $0x98] sm:$0xff]
        %v584 = vld [vmem:[#allocation5 + $0xa0] sm:$0xff]
        %v585 = vld [vmem:[#allocation5 + $0xa8] sm:$0xff]
        %v586 = vld [vmem:[#allocation5 + $0xb0] sm:$0xff]
        %v587 = vld [vmem:[#allocation5 + $0xb8] sm:$0xff]
        %v588 = vld [vmem:[#allocation5 + $0xc0] sm:$0xff]
        %v589 = vld [vmem:[#allocation5 + $0xc8] sm:$0xff]
        %v590 = vld [vmem:[#allocation5 + $0xd0] sm:$0xff]
        %v591 = vld [vmem:[#allocation5 + $0xd8] sm:$0xff]
        %v592 = vld [vmem:[#allocation5 + $0xe0] sm:$0xff]
        %v593 = vld [vmem:[#allocation5 + $0xe8] sm:$0xff]
        %v594 = vld [vmem:[#allocation5 + $0xf0] sm:$0xff]
        %v595 = vld [vmem:[#allocation5 + $0xf8] sm:$0xff]
        %v596 = vld [vmem:[#allocation5 + $0x100] sm:$0xff]
        %v597 = vld [vmem:[#allocation5 + $0x108] sm:$0xff]
        %v598 = vld [vmem:[#allocation5 + $0x110] sm:$0xff]
        %v599 = vld [vmem:[#allocation5 + $0x118] sm:$0xff]
        %v600 = vld [vmem:[#allocation5 + $0x120] sm:$0xff]
        %v601 = vld [vmem:[#allocation5 + $0x128] sm:$0xff]
        %v602 = vld [vmem:[#allocation5 + $0x130] sm:$0xff]
        %v603 = vld [vmem:[#allocation5 + $0x138] sm:$0xff]
        %v604 = vld [vmem:[#allocation5 + $0x140] sm:$0xff]
        %v605 = vld [vmem:[#allocation5 + $0x148] sm:$0xff]
        %v606 = vld [vmem:[#allocation5 + $0x150] sm:$0xff]
        %v607 = vld [vmem:[#allocation5 + $0x158] sm:$0xff]
        %v608 = vld [vmem:[#allocation5 + $0x160] sm:$0xff]
        %v609 = vld [vmem:[#allocation5 + $0x168] sm:$0xff]
        %v610 = vld [vmem:[#allocation5 + $0x170] sm:$0xff]
        %v611 = vld [vmem:[#allocation5 + $0x178] sm:$0xff]
        %v612 = vld [vmem:[#allocation5 + $0x180] sm:$0xff]
        %v613 = vld [vmem:[#allocation5 + $0x188] sm:$0xff]
        %v614 = vld [vmem:[#allocation5 + $0x190] sm:$0xff]
        %v615 = vld [vmem:[#allocation5 + $0x198] sm:$0xff]
        %v616 = vld [vmem:[#allocation5 + $0x1a0] sm:$0xff]
        %v617 = vld [vmem:[#allocation5 + $0x1a8] sm:$0xff]
        %v618 = vld [vmem:[#allocation5 + $0x1b0] sm:$0xff]
        %v619 = vld [vmem:[#allocation5 + $0x1b8] sm:$0xff]
        %v620 = vld [vmem:[#allocation5 + $0x1c0] sm:$0xff]
        %v621 = vld [vmem:[#allocation5 + $0x1c8] sm:$0xff]
        %v622 = vld [vmem:[#allocation5 + $0x1d0] sm:$0xff]
        %v623 = vld [vmem:[#allocation5 + $0x1d8] sm:$0xff]
        %v624 = vld [vmem:[#allocation5 + $0x1e0] sm:$0xff]
        %v625 = vld [vmem:[#allocation5 + $0x1e8] sm:$0xff]
        %v626 = vld [vmem:[#allocation5 + $0x1f0] sm:$0xff]
        %v627 = vld [vmem:[#allocation5 + $0x1f8] sm:$0xff]
        %s628 = scalar_lea.vmem [#allocation2], 4
        %v629 = vld [vmem:[%s628] sm:$0xf]
        %v631 = vsel %vm536, %v629, 0
        %633 = vmatpush.msra.mxu0 0.0
        %634 = vmatpush.msra.mxu0 0.0
        %635 = vmatpush.msra.mxu0 0.0
        %636 = vmatpush.msra.mxu0 0.0
        %637 = vmatpush.msra.mxu0 0.0
        %638 = vmatpush.msra.mxu0 0.0
        %639 = vmatpush.msra.mxu0 0.0
        %640 = vmatpush.msra.mxu0 0.0
        %641 = vmatpush.msra.mxu0 0.0
        %642 = vmatpush.msra.mxu0 0.0
        %643 = vmatpush.msra.mxu0 0.0
        %644 = vmatpush.msra.mxu0 0.0
        %645 = vmatpush.msra.mxu0 0.0
        %646 = vmatpush.msra.mxu0 0.0
        %647 = vmatpush.msra.mxu0 0.0
        %648 = vmatpush.msra.mxu0 %v542
        %649 = vmatmul.f32.gmra.mxu0 %v631
        %v650 = vpop.f32.mrf.mxu0
        %v651 = vadd.f32 0.0, %v650
        %652 = vdwg.mxu0
        %s653 = scalar_lea.vmem [#allocation5], 512
        %v654 = vld [vmem:[%s653] sm:$0xff]
        %v655 = vld [vmem:[%s653 + $0x8] sm:$0xff]
        %v656 = vld [vmem:[%s653 + $0x10] sm:$0xff]
        %v657 = vld [vmem:[%s653 + $0x18] sm:$0xff]
        %v658 = vld [vmem:[%s653 + $0x20] sm:$0xff]
        %v659 = vld [vmem:[%s653 + $0x28] sm:$0xff]
        %v660 = vld [vmem:[%s653 + $0x30] sm:$0xff]
        %v661 = vld [vmem:[%s653 + $0x38] sm:$0xff]
        %v662 = vld [vmem:[%s653 + $0x40] sm:$0xff]
        %v663 = vld [vmem:[%s653 + $0x48] sm:$0xff]
        %v664 = vld [vmem:[%s653 + $0x50] sm:$0xff]
        %v665 = vld [vmem:[%s653 + $0x58] sm:$0xff]
        %v666 = vld [vmem:[%s653 + $0x60] sm:$0xff]
        %v667 = vld [vmem:[%s653 + $0x68] sm:$0xff]
        %v668 = vld [vmem:[%s653 + $0x70] sm:$0xff]
        %v669 = vld [vmem:[%s653 + $0x78] sm:$0xff]
        %v670 = vld [vmem:[%s653 + $0x80] sm:$0xff]
        %v671 = vld [vmem:[%s653 + $0x88] sm:$0xff]
        %v672 = vld [vmem:[%s653 + $0x90] sm:$0xff]
        %v673 = vld [vmem:[%s653 + $0x98] sm:$0xff]
        %v674 = vld [vmem:[%s653 + $0xa0] sm:$0xff]
        %v675 = vld [vmem:[%s653 + $0xa8] sm:$0xff]
        %v676 = vld [vmem:[%s653 + $0xb0] sm:$0xff]
        %v677 = vld [vmem:[%s653 + $0xb8] sm:$0xff]
        %v678 = vld [vmem:[%s653 + $0xc0] sm:$0xff]
        %v679 = vld [vmem:[%s653 + $0xc8] sm:$0xff]
        %v680 = vld [vmem:[%s653 + $0xd0] sm:$0xff]
        %v681 = vld [vmem:[%s653 + $0xd8] sm:$0xff]
        %v682 = vld [vmem:[%s653 + $0xe0] sm:$0xff]
        %v683 = vld [vmem:[%s653 + $0xe8] sm:$0xff]
        %v684 = vld [vmem:[%s653 + $0xf0] sm:$0xff]
        %v685 = vld [vmem:[%s653 + $0xf8] sm:$0xff]
        %v686 = vld [vmem:[%s653 + $0x100] sm:$0xff]
        %v687 = vld [vmem:[%s653 + $0x108] sm:$0xff]
        %v688 = vld [vmem:[%s653 + $0x110] sm:$0xff]
        %v689 = vld [vmem:[%s653 + $0x118] sm:$0xff]
        %v690 = vld [vmem:[%s653 + $0x120] sm:$0xff]
        %v691 = vld [vmem:[%s653 + $0x128] sm:$0xff]
        %v692 = vld [vmem:[%s653 + $0x130] sm:$0xff]
        %v693 = vld [vmem:[%s653 + $0x138] sm:$0xff]
        %v694 = vld [vmem:[%s653 + $0x140] sm:$0xff]
        %v695 = vld [vmem:[%s653 + $0x148] sm:$0xff]
        %v696 = vld [vmem:[%s653 + $0x150] sm:$0xff]
        %v697 = vld [vmem:[%s653 + $0x158] sm:$0xff]
        %v698 = vld [vmem:[%s653 + $0x160] sm:$0xff]
        %v699 = vld [vmem:[%s653 + $0x168] sm:$0xff]
        %v700 = vld [vmem:[%s653 + $0x170] sm:$0xff]
        %v701 = vld [vmem:[%s653 + $0x178] sm:$0xff]
        %v702 = vld [vmem:[%s653 + $0x180] sm:$0xff]
        %v703 = vld [vmem:[%s653 + $0x188] sm:$0xff]
        %v704 = vld [vmem:[%s653 + $0x190] sm:$0xff]
        %v705 = vld [vmem:[%s653 + $0x198] sm:$0xff]
        %v706 = vld [vmem:[%s653 + $0x1a0] sm:$0xff]
        %v707 = vld [vmem:[%s653 + $0x1a8] sm:$0xff]
        %v708 = vld [vmem:[%s653 + $0x1b0] sm:$0xff]
        %v709 = vld [vmem:[%s653 + $0x1b8] sm:$0xff]
        %v710 = vld [vmem:[%s653 + $0x1c0] sm:$0xff]
        %v711 = vld [vmem:[%s653 + $0x1c8] sm:$0xff]
        %v712 = vld [vmem:[%s653 + $0x1d0] sm:$0xff]
        %v713 = vld [vmem:[%s653 + $0x1d8] sm:$0xff]
        %v714 = vld [vmem:[%s653 + $0x1e0] sm:$0xff]
        %v715 = vld [vmem:[%s653 + $0x1e8] sm:$0xff]
        %v716 = vld [vmem:[%s653 + $0x1f0] sm:$0xff]
        %v717 = vld [vmem:[%s653 + $0x1f8] sm:$0xff]
        %718 = vmatpush.msra.mxu0 %v714
        %719 = vmatpush.msra.mxu0 %v710
        %720 = vmatpush.msra.mxu0 %v706
        %721 = vmatpush.msra.mxu0 %v702
        %722 = vmatpush.msra.mxu0 %v698
        %723 = vmatpush.msra.mxu0 %v694
        %724 = vmatpush.msra.mxu0 %v690
        %725 = vmatpush.msra.mxu0 %v686
        %726 = vmatpush.msra.mxu0 %v682
        %727 = vmatpush.msra.mxu0 %v678
        %728 = vmatpush.msra.mxu0 %v674
        %729 = vmatpush.msra.mxu0 %v670
        %730 = vmatpush.msra.mxu0 %v666
        %731 = vmatpush.msra.mxu0 %v662
        %732 = vmatpush.msra.mxu0 %v658
        %733 = vmatpush.msra.mxu0 %v654
        %734 = vmatmul.f32.gmra.mxu0 %v651
        %v735 = vpop.f32.mrf.mxu0
        %v736 = vadd.f32 0.0, %v735
        %737 = vdwg.mxu0
        %738 = vmatpush.msra.mxu0 %v715
        %739 = vmatpush.msra.mxu0 %v711
        %740 = vmatpush.msra.mxu0 %v707
        %741 = vmatpush.msra.mxu0 %v703
        %742 = vmatpush.msra.mxu0 %v699
        %743 = vmatpush.msra.mxu0 %v695
        %744 = vmatpush.msra.mxu0 %v691
        %745 = vmatpush.msra.mxu0 %v687
        %746 = vmatpush.msra.mxu0 %v683
        %747 = vmatpush.msra.mxu0 %v679
        %748 = vmatpush.msra.mxu0 %v675
        %749 = vmatpush.msra.mxu0 %v671
        %750 = vmatpush.msra.mxu0 %v667
        %751 = vmatpush.msra.mxu0 %v663
        %752 = vmatpush.msra.mxu0 %v659
        %753 = vmatpush.msra.mxu0 %v655
        %754 = vmatmul.f32.gmra.mxu0 %v651
        %v755 = vpop.f32.mrf.mxu0
        %v756 = vadd.f32 0.0, %v755
        %757 = vdwg.mxu0
        %758 = vmatpush.msra.mxu0 %v716
        %759 = vmatpush.msra.mxu0 %v712
        %760 = vmatpush.msra.mxu0 %v708
        %761 = vmatpush.msra.mxu0 %v704
        %762 = vmatpush.msra.mxu0 %v700
        %763 = vmatpush.msra.mxu0 %v696
        %764 = vmatpush.msra.mxu0 %v692
        %765 = vmatpush.msra.mxu0 %v688
        %766 = vmatpush.msra.mxu0 %v684
        %767 = vmatpush.msra.mxu0 %v680
        %768 = vmatpush.msra.mxu0 %v676
        %769 = vmatpush.msra.mxu0 %v672
        %770 = vmatpush.msra.mxu0 %v668
        %771 = vmatpush.msra.mxu0 %v664
        %772 = vmatpush.msra.mxu0 %v660
        %773 = vmatpush.msra.mxu0 %v656
        %774 = vmatmul.f32.gmra.mxu0 %v651
        %v775 = vpop.f32.mrf.mxu0
        %v776 = vadd.f32 0.0, %v775
        %777 = vdwg.mxu0
        %778 = vmatpush.msra.mxu0 %v717
        %779 = vmatpush.msra.mxu0 %v713
        %780 = vmatpush.msra.mxu0 %v709
        %781 = vmatpush.msra.mxu0 %v705
        %782 = vmatpush.msra.mxu0 %v701
        %783 = vmatpush.msra.mxu0 %v697
        %784 = vmatpush.msra.mxu0 %v693
        %785 = vmatpush.msra.mxu0 %v689
        %786 = vmatpush.msra.mxu0 %v685
        %787 = vmatpush.msra.mxu0 %v681
        %788 = vmatpush.msra.mxu0 %v677
        %789 = vmatpush.msra.mxu0 %v673
        %790 = vmatpush.msra.mxu0 %v669
        %791 = vmatpush.msra.mxu0 %v665
        %792 = vmatpush.msra.mxu0 %v661
        %793 = vmatpush.msra.mxu0 %v657
        %794 = vmatmul.f32.gmra.mxu0 %v651
        %v795 = vpop.f32.mrf.mxu0
        %v796 = vadd.f32 0.0, %v795
        %797 = vdwg.mxu0
        %798 = vmatpush.msra.mxu0 %v624
        %799 = vmatpush.msra.mxu0 %v620
        %800 = vmatpush.msra.mxu0 %v616
        %801 = vmatpush.msra.mxu0 %v612
        %802 = vmatpush.msra.mxu0 %v608
        %803 = vmatpush.msra.mxu0 %v604
        %804 = vmatpush.msra.mxu0 %v600
        %805 = vmatpush.msra.mxu0 %v596
        %806 = vmatpush.msra.mxu0 %v592
        %807 = vmatpush.msra.mxu0 %v588
        %808 = vmatpush.msra.mxu0 %v584
        %809 = vmatpush.msra.mxu0 %v580
        %810 = vmatpush.msra.mxu0 %v576
        %811 = vmatpush.msra.mxu0 %v572
        %812 = vmatpush.msra.mxu0 %v568
        %813 = vmatpush.msra.mxu0 %v564
        %814 = vmatmul.f32.gmra.mxu0 %v562
        %v815 = vpop.f32.mrf.mxu0
        %v816 = vadd.f32 %v736, %v815
        %817 = vdwg.mxu0
        %818 = vmatpush.msra.mxu0 %v625
        %819 = vmatpush.msra.mxu0 %v621
        %820 = vmatpush.msra.mxu0 %v617
        %821 = vmatpush.msra.mxu0 %v613
        %822 = vmatpush.msra.mxu0 %v609
        %823 = vmatpush.msra.mxu0 %v605
        %824 = vmatpush.msra.mxu0 %v601
        %825 = vmatpush.msra.mxu0 %v597
        %826 = vmatpush.msra.mxu0 %v593
        %827 = vmatpush.msra.mxu0 %v589
        %828 = vmatpush.msra.mxu0 %v585
        %829 = vmatpush.msra.mxu0 %v581
        %830 = vmatpush.msra.mxu0 %v577
        %831 = vmatpush.msra.mxu0 %v573
        %832 = vmatpush.msra.mxu0 %v569
        %833 = vmatpush.msra.mxu0 %v565
        %834 = vmatmul.f32.gmra.mxu0 %v562
        %v835 = vpop.f32.mrf.mxu0
        %v836 = vadd.f32 %v756, %v835
        %837 = vdwg.mxu0
        %838 = vmatpush.msra.mxu0 %v626
        %839 = vmatpush.msra.mxu0 %v622
        %840 = vmatpush.msra.mxu0 %v618
        %841 = vmatpush.msra.mxu0 %v614
        %842 = vmatpush.msra.mxu0 %v610
        %843 = vmatpush.msra.mxu0 %v606
        %844 = vmatpush.msra.mxu0 %v602
        %845 = vmatpush.msra.mxu0 %v598
        %846 = vmatpush.msra.mxu0 %v594
        %847 = vmatpush.msra.mxu0 %v590
        %848 = vmatpush.msra.mxu0 %v586
        %849 = vmatpush.msra.mxu0 %v582
        %850 = vmatpush.msra.mxu0 %v578
        %851 = vmatpush.msra.mxu0 %v574
        %852 = vmatpush.msra.mxu0 %v570
        %853 = vmatpush.msra.mxu0 %v566
        %854 = vmatmul.f32.gmra.mxu0 %v562
        %v855 = vpop.f32.mrf.mxu0
        %v856 = vadd.f32 %v776, %v855
        %857 = vdwg.mxu0
        %858 = vmatpush.msra.mxu0 %v627
        %859 = vmatpush.msra.mxu0 %v623
        %860 = vmatpush.msra.mxu0 %v619
        %861 = vmatpush.msra.mxu0 %v615
        %862 = vmatpush.msra.mxu0 %v611
        %863 = vmatpush.msra.mxu0 %v607
        %864 = vmatpush.msra.mxu0 %v603
        %865 = vmatpush.msra.mxu0 %v599
        %866 = vmatpush.msra.mxu0 %v595
        %867 = vmatpush.msra.mxu0 %v591
        %868 = vmatpush.msra.mxu0 %v587
        %869 = vmatpush.msra.mxu0 %v583
        %870 = vmatpush.msra.mxu0 %v579
        %871 = vmatpush.msra.mxu0 %v575
        %872 = vmatpush.msra.mxu0 %v571
        %873 = vmatpush.msra.mxu0 %v567
        %874 = vmatmul.f32.gmra.mxu0 %v562
        %v875 = vpop.f32.mrf.mxu0
        %v876 = vadd.f32 %v796, %v875
        %877 = vdwg.mxu0
        %s878 = scalar_lea.vmem [#allocation2], 8
        %v879 = vld [vmem:[%s878] sm:$0xf]
        %v881 = vsel %vm536, %v879, 0
        %883 = vmatpush.msra.mxu0 0.0
        %884 = vmatpush.msra.mxu0 0.0
        %885 = vmatpush.msra.mxu0 0.0
        %886 = vmatpush.msra.mxu0 0.0
        %887 = vmatpush.msra.mxu0 0.0
        %888 = vmatpush.msra.mxu0 0.0
        %889 = vmatpush.msra.mxu0 0.0
        %890 = vmatpush.msra.mxu0 0.0
        %891 = vmatpush.msra.mxu0 0.0
        %892 = vmatpush.msra.mxu0 0.0
        %893 = vmatpush.msra.mxu0 0.0
        %894 = vmatpush.msra.mxu0 0.0
        %895 = vmatpush.msra.mxu0 0.0
        %896 = vmatpush.msra.mxu0 0.0
        %897 = vmatpush.msra.mxu0 0.0
        %898 = vmatpush.msra.mxu0 %v542
        %899 = vmatmul.f32.gmra.mxu0 %v881
        %v900 = vpop.f32.mrf.mxu0
        %v901 = vadd.f32 0.0, %v900
        %902 = vdwg.mxu0
        %s903 = scalar_lea.vmem [#allocation5], 1024
        %v904 = vld [vmem:[%s903] sm:$0xff]
        %v905 = vld [vmem:[%s903 + $0x8] sm:$0xff]
        %v906 = vld [vmem:[%s903 + $0x10] sm:$0xff]
        %v907 = vld [vmem:[%s903 + $0x18] sm:$0xff]
        %v908 = vld [vmem:[%s903 + $0x20] sm:$0xff]
        %v909 = vld [vmem:[%s903 + $0x28] sm:$0xff]
        %v910 = vld [vmem:[%s903 + $0x30] sm:$0xff]
        %v911 = vld [vmem:[%s903 + $0x38] sm:$0xff]
        %v912 = vld [vmem:[%s903 + $0x40] sm:$0xff]
        %v913 = vld [vmem:[%s903 + $0x48] sm:$0xff]
        %v914 = vld [vmem:[%s903 + $0x50] sm:$0xff]
        %v915 = vld [vmem:[%s903 + $0x58] sm:$0xff]
        %v916 = vld [vmem:[%s903 + $0x60] sm:$0xff]
        %v917 = vld [vmem:[%s903 + $0x68] sm:$0xff]
        %v918 = vld [vmem:[%s903 + $0x70] sm:$0xff]
        %v919 = vld [vmem:[%s903 + $0x78] sm:$0xff]
        %v920 = vld [vmem:[%s903 + $0x80] sm:$0xff]
        %v921 = vld [vmem:[%s903 + $0x88] sm:$0xff]
        %v922 = vld [vmem:[%s903 + $0x90] sm:$0xff]
        %v923 = vld [vmem:[%s903 + $0x98] sm:$0xff]
        %v924 = vld [vmem:[%s903 + $0xa0] sm:$0xff]
        %v925 = vld [vmem:[%s903 + $0xa8] sm:$0xff]
        %v926 = vld [vmem:[%s903 + $0xb0] sm:$0xff]
        %v927 = vld [vmem:[%s903 + $0xb8] sm:$0xff]
        %v928 = vld [vmem:[%s903 + $0xc0] sm:$0xff]
        %v929 = vld [vmem:[%s903 + $0xc8] sm:$0xff]
        %v930 = vld [vmem:[%s903 + $0xd0] sm:$0xff]
        %v931 = vld [vmem:[%s903 + $0xd8] sm:$0xff]
        %v932 = vld [vmem:[%s903 + $0xe0] sm:$0xff]
        %v933 = vld [vmem:[%s903 + $0xe8] sm:$0xff]
        %v934 = vld [vmem:[%s903 + $0xf0] sm:$0xff]
        %v935 = vld [vmem:[%s903 + $0xf8] sm:$0xff]
        %v936 = vld [vmem:[%s903 + $0x100] sm:$0xff]
        %v937 = vld [vmem:[%s903 + $0x108] sm:$0xff]
        %v938 = vld [vmem:[%s903 + $0x110] sm:$0xff]
        %v939 = vld [vmem:[%s903 + $0x118] sm:$0xff]
        %v940 = vld [vmem:[%s903 + $0x120] sm:$0xff]
        %v941 = vld [vmem:[%s903 + $0x128] sm:$0xff]
        %v942 = vld [vmem:[%s903 + $0x130] sm:$0xff]
        %v943 = vld [vmem:[%s903 + $0x138] sm:$0xff]
        %v944 = vld [vmem:[%s903 + $0x140] sm:$0xff]
        %v945 = vld [vmem:[%s903 + $0x148] sm:$0xff]
        %v946 = vld [vmem:[%s903 + $0x150] sm:$0xff]
        %v947 = vld [vmem:[%s903 + $0x158] sm:$0xff]
        %v948 = vld [vmem:[%s903 + $0x160] sm:$0xff]
        %v949 = vld [vmem:[%s903 + $0x168] sm:$0xff]
        %v950 = vld [vmem:[%s903 + $0x170] sm:$0xff]
        %v951 = vld [vmem:[%s903 + $0x178] sm:$0xff]
        %v952 = vld [vmem:[%s903 + $0x180] sm:$0xff]
        %v953 = vld [vmem:[%s903 + $0x188] sm:$0xff]
        %v954 = vld [vmem:[%s903 + $0x190] sm:$0xff]
        %v955 = vld [vmem:[%s903 + $0x198] sm:$0xff]
        %v956 = vld [vmem:[%s903 + $0x1a0] sm:$0xff]
        %v957 = vld [vmem:[%s903 + $0x1a8] sm:$0xff]
        %v958 = vld [vmem:[%s903 + $0x1b0] sm:$0xff]
        %v959 = vld [vmem:[%s903 + $0x1b8] sm:$0xff]
        %v960 = vld [vmem:[%s903 + $0x1c0] sm:$0xff]
        %v961 = vld [vmem:[%s903 + $0x1c8] sm:$0xff]
        %v962 = vld [vmem:[%s903 + $0x1d0] sm:$0xff]
        %v963 = vld [vmem:[%s903 + $0x1d8] sm:$0xff]
        %v964 = vld [vmem:[%s903 + $0x1e0] sm:$0xff]
        %v965 = vld [vmem:[%s903 + $0x1e8] sm:$0xff]
        %v966 = vld [vmem:[%s903 + $0x1f0] sm:$0xff]
        %v967 = vld [vmem:[%s903 + $0x1f8] sm:$0xff]
        %968 = vmatpush.msra.mxu0 %v964
        %969 = vmatpush.msra.mxu0 %v960
        %970 = vmatpush.msra.mxu0 %v956
        %971 = vmatpush.msra.mxu0 %v952
        %972 = vmatpush.msra.mxu0 %v948
        %973 = vmatpush.msra.mxu0 %v944
        %974 = vmatpush.msra.mxu0 %v940
        %975 = vmatpush.msra.mxu0 %v936
        %976 = vmatpush.msra.mxu0 %v932
        %977 = vmatpush.msra.mxu0 %v928
        %978 = vmatpush.msra.mxu0 %v924
        %979 = vmatpush.msra.mxu0 %v920
        %980 = vmatpush.msra.mxu0 %v916
        %981 = vmatpush.msra.mxu0 %v912
        %982 = vmatpush.msra.mxu0 %v908
        %983 = vmatpush.msra.mxu0 %v904
        %984 = vmatmul.f32.gmra.mxu0 %v901
        %v985 = vpop.f32.mrf.mxu0
        %v986 = vadd.f32 0.0, %v985
        %987 = vdwg.mxu0
        %988 = vmatpush.msra.mxu0 %v965
        %989 = vmatpush.msra.mxu0 %v961
        %990 = vmatpush.msra.mxu0 %v957
        %991 = vmatpush.msra.mxu0 %v953
        %992 = vmatpush.msra.mxu0 %v949
        %993 = vmatpush.msra.mxu0 %v945
        %994 = vmatpush.msra.mxu0 %v941
        %995 = vmatpush.msra.mxu0 %v937
        %996 = vmatpush.msra.mxu0 %v933
        %997 = vmatpush.msra.mxu0 %v929
        %998 = vmatpush.msra.mxu0 %v925
        %999 = vmatpush.msra.mxu0 %v921
        %1000 = vmatpush.msra.mxu0 %v917
        %1001 = vmatpush.msra.mxu0 %v913
        %1002 = vmatpush.msra.mxu0 %v909
        %1003 = vmatpush.msra.mxu0 %v905
        %1004 = vmatmul.f32.gmra.mxu0 %v901
        %v1005 = vpop.f32.mrf.mxu0
        %v1006 = vadd.f32 0.0, %v1005
        %1007 = vdwg.mxu0
        %1008 = vmatpush.msra.mxu0 %v966
        %1009 = vmatpush.msra.mxu0 %v962
        %1010 = vmatpush.msra.mxu0 %v958
        %1011 = vmatpush.msra.mxu0 %v954
        %1012 = vmatpush.msra.mxu0 %v950
        %1013 = vmatpush.msra.mxu0 %v946
        %1014 = vmatpush.msra.mxu0 %v942
        %1015 = vmatpush.msra.mxu0 %v938
        %1016 = vmatpush.msra.mxu0 %v934
        %1017 = vmatpush.msra.mxu0 %v930
        %1018 = vmatpush.msra.mxu0 %v926
        %1019 = vmatpush.msra.mxu0 %v922
        %1020 = vmatpush.msra.mxu0 %v918
        %1021 = vmatpush.msra.mxu0 %v914
        %1022 = vmatpush.msra.mxu0 %v910
        %1023 = vmatpush.msra.mxu0 %v906
        %1024 = vmatmul.f32.gmra.mxu0 %v901
        %v1025 = vpop.f32.mrf.mxu0
        %v1026 = vadd.f32 0.0, %v1025
        %1027 = vdwg.mxu0
        %1028 = vmatpush.msra.mxu0 %v967
        %1029 = vmatpush.msra.mxu0 %v963
        %1030 = vmatpush.msra.mxu0 %v959
        %1031 = vmatpush.msra.mxu0 %v955
        %1032 = vmatpush.msra.mxu0 %v951
        %1033 = vmatpush.msra.mxu0 %v947
        %1034 = vmatpush.msra.mxu0 %v943
        %1035 = vmatpush.msra.mxu0 %v939
        %1036 = vmatpush.msra.mxu0 %v935
        %1037 = vmatpush.msra.mxu0 %v931
        %1038 = vmatpush.msra.mxu0 %v927
        %1039 = vmatpush.msra.mxu0 %v923
        %1040 = vmatpush.msra.mxu0 %v919
        %1041 = vmatpush.msra.mxu0 %v915
        %1042 = vmatpush.msra.mxu0 %v911
        %1043 = vmatpush.msra.mxu0 %v907
        %1044 = vmatmul.f32.gmra.mxu0 %v901
        %v1045 = vpop.f32.mrf.mxu0
        %v1046 = vadd.f32 0.0, %v1045
        %1047 = vdwg.mxu0
        %v1048 = vadd.f32 %v816, %v986
        %v1049 = vadd.f32 %v836, %v1006
        %v1050 = vadd.f32 %v856, %v1026
        %v1051 = vadd.f32 %v876, %v1046
        %s1052 = scalar_lea.vmem [#allocation2], 12
        %v1053 = vld [vmem:[%s1052] sm:$0xf]
        %v1055 = vsel %vm536, %v1053, 0
        %v1058 = vsel %vm540, %v495, 0
        %1060 = vmatpush.msra.mxu0 0.0
        %1061 = vmatpush.msra.mxu0 0.0
        %1062 = vmatpush.msra.mxu0 0.0
        %1063 = vmatpush.msra.mxu0 0.0
        %1064 = vmatpush.msra.mxu0 0.0
        %1065 = vmatpush.msra.mxu0 0.0
        %1066 = vmatpush.msra.mxu0 0.0
        %1067 = vmatpush.msra.mxu0 0.0
        %1068 = vmatpush.msra.mxu0 0.0
        %1069 = vmatpush.msra.mxu0 0.0
        %1070 = vmatpush.msra.mxu0 0.0
        %1071 = vmatpush.msra.mxu0 0.0
        %1072 = vmatpush.msra.mxu0 0.0
        %1073 = vmatpush.msra.mxu0 0.0
        %1074 = vmatpush.msra.mxu0 0.0
        %1075 = vmatpush.msra.mxu0 %v1058
        %1076 = vmatmul.f32.gmra.mxu0 %v1055
        %v1077 = vpop.f32.mrf.mxu0
        %v1078 = vadd.f32 0.0, %v1077
        %1079 = vdwg.mxu0
        %1080 = vmatpush.msra.mxu0 %v624
        %1081 = vmatpush.msra.mxu0 %v620
        %1082 = vmatpush.msra.mxu0 %v616
        %1083 = vmatpush.msra.mxu0 %v612
        %1084 = vmatpush.msra.mxu0 %v608
        %1085 = vmatpush.msra.mxu0 %v604
        %1086 = vmatpush.msra.mxu0 %v600
        %1087 = vmatpush.msra.mxu0 %v596
        %1088 = vmatpush.msra.mxu0 %v592
        %1089 = vmatpush.msra.mxu0 %v588
        %1090 = vmatpush.msra.mxu0 %v584
        %1091 = vmatpush.msra.mxu0 %v580
        %1092 = vmatpush.msra.mxu0 %v576
        %1093 = vmatpush.msra.mxu0 %v572
        %1094 = vmatpush.msra.mxu0 %v568
        %1095 = vmatpush.msra.mxu0 %v564
        %1096 = vmatmul.f32.gmra.mxu0 %v1078
        %v1097 = vpop.f32.mrf.mxu0
        %v1098 = vadd.f32 0.0, %v1097
        %1099 = vdwg.mxu0
        %1100 = vmatpush.msra.mxu0 %v625
        %1101 = vmatpush.msra.mxu0 %v621
        %1102 = vmatpush.msra.mxu0 %v617
        %1103 = vmatpush.msra.mxu0 %v613
        %1104 = vmatpush.msra.mxu0 %v609
        %1105 = vmatpush.msra.mxu0 %v605
        %1106 = vmatpush.msra.mxu0 %v601
        %1107 = vmatpush.msra.mxu0 %v597
        %1108 = vmatpush.msra.mxu0 %v593
        %1109 = vmatpush.msra.mxu0 %v589
        %1110 = vmatpush.msra.mxu0 %v585
        %1111 = vmatpush.msra.mxu0 %v581
        %1112 = vmatpush.msra.mxu0 %v577
        %1113 = vmatpush.msra.mxu0 %v573
        %1114 = vmatpush.msra.mxu0 %v569
        %1115 = vmatpush.msra.mxu0 %v565
        %1116 = vmatmul.f32.gmra.mxu0 %v1078
        %v1117 = vpop.f32.mrf.mxu0
        %v1118 = vadd.f32 0.0, %v1117
        %1119 = vdwg.mxu0
        %1120 = vmatpush.msra.mxu0 %v626
        %1121 = vmatpush.msra.mxu0 %v622
        %1122 = vmatpush.msra.mxu0 %v618
        %1123 = vmatpush.msra.mxu0 %v614
        %1124 = vmatpush.msra.mxu0 %v610
        %1125 = vmatpush.msra.mxu0 %v606
        %1126 = vmatpush.msra.mxu0 %v602
        %1127 = vmatpush.msra.mxu0 %v598
        %1128 = vmatpush.msra.mxu0 %v594
        %1129 = vmatpush.msra.mxu0 %v590
        %1130 = vmatpush.msra.mxu0 %v586
        %1131 = vmatpush.msra.mxu0 %v582
        %1132 = vmatpush.msra.mxu0 %v578
        %1133 = vmatpush.msra.mxu0 %v574
        %1134 = vmatpush.msra.mxu0 %v570
        %1135 = vmatpush.msra.mxu0 %v566
        %1136 = vmatmul.f32.gmra.mxu0 %v1078
        %v1137 = vpop.f32.mrf.mxu0
        %v1138 = vadd.f32 0.0, %v1137
        %1139 = vdwg.mxu0
        %1140 = vmatpush.msra.mxu0 %v627
        %1141 = vmatpush.msra.mxu0 %v623
        %1142 = vmatpush.msra.mxu0 %v619
        %1143 = vmatpush.msra.mxu0 %v615
        %1144 = vmatpush.msra.mxu0 %v611
        %1145 = vmatpush.msra.mxu0 %v607
        %1146 = vmatpush.msra.mxu0 %v603
        %1147 = vmatpush.msra.mxu0 %v599
        %1148 = vmatpush.msra.mxu0 %v595
        %1149 = vmatpush.msra.mxu0 %v591
        %1150 = vmatpush.msra.mxu0 %v587
        %1151 = vmatpush.msra.mxu0 %v583
        %1152 = vmatpush.msra.mxu0 %v579
        %1153 = vmatpush.msra.mxu0 %v575
        %1154 = vmatpush.msra.mxu0 %v571
        %1155 = vmatpush.msra.mxu0 %v567
        %1156 = vmatmul.f32.gmra.mxu0 %v1078
        %v1157 = vpop.f32.mrf.mxu0
        %v1158 = vadd.f32 0.0, %v1157
        %1159 = vdwg.mxu0
        %v1160 = vadd.f32 %v1048, %v1098
        %v1161 = vadd.f32 %v1049, %v1118
        %v1162 = vadd.f32 %v1050, %v1138
        %v1163 = vadd.f32 %v1051, %v1158
        %s1164 = scalar_lea.vmem [#allocation2], 16
        %v1165 = vld [vmem:[%s1164] sm:$0xf]
        %v1167 = vsel %vm536, %v1165, 0
        %1169 = vmatpush.msra.mxu0 0.0
        %1170 = vmatpush.msra.mxu0 0.0
        %1171 = vmatpush.msra.mxu0 0.0
        %1172 = vmatpush.msra.mxu0 0.0
        %1173 = vmatpush.msra.mxu0 0.0
        %1174 = vmatpush.msra.mxu0 0.0
        %1175 = vmatpush.msra.mxu0 0.0
        %1176 = vmatpush.msra.mxu0 0.0
        %1177 = vmatpush.msra.mxu0 0.0
        %1178 = vmatpush.msra.mxu0 0.0
        %1179 = vmatpush.msra.mxu0 0.0
        %1180 = vmatpush.msra.mxu0 0.0
        %1181 = vmatpush.msra.mxu0 0.0
        %1182 = vmatpush.msra.mxu0 0.0
        %1183 = vmatpush.msra.mxu0 0.0
        %1184 = vmatpush.msra.mxu0 %v1058
        %1185 = vmatmul.f32.gmra.mxu0 %v1167
        %v1186 = vpop.f32.mrf.mxu0
        %v1187 = vadd.f32 0.0, %v1186
        %1188 = vdwg.mxu0
        %1189 = vmatpush.msra.mxu0 %v714
        %1190 = vmatpush.msra.mxu0 %v710
        %1191 = vmatpush.msra.mxu0 %v706
        %1192 = vmatpush.msra.mxu0 %v702
        %1193 = vmatpush.msra.mxu0 %v698
        %1194 = vmatpush.msra.mxu0 %v694
        %1195 = vmatpush.msra.mxu0 %v690
        %1196 = vmatpush.msra.mxu0 %v686
        %1197 = vmatpush.msra.mxu0 %v682
        %1198 = vmatpush.msra.mxu0 %v678
        %1199 = vmatpush.msra.mxu0 %v674
        %1200 = vmatpush.msra.mxu0 %v670
        %1201 = vmatpush.msra.mxu0 %v666
        %1202 = vmatpush.msra.mxu0 %v662
        %1203 = vmatpush.msra.mxu0 %v658
        %1204 = vmatpush.msra.mxu0 %v654
        %1205 = vmatmul.f32.gmra.mxu0 %v1187
        %v1206 = vpop.f32.mrf.mxu0
        %v1207 = vadd.f32 0.0, %v1206
        %1208 = vdwg.mxu0
        %1209 = vmatpush.msra.mxu0 %v715
        %1210 = vmatpush.msra.mxu0 %v711
        %1211 = vmatpush.msra.mxu0 %v707
        %1212 = vmatpush.msra.mxu0 %v703
        %1213 = vmatpush.msra.mxu0 %v699
        %1214 = vmatpush.msra.mxu0 %v695
        %1215 = vmatpush.msra.mxu0 %v691
        %1216 = vmatpush.msra.mxu0 %v687
        %1217 = vmatpush.msra.mxu0 %v683
        %1218 = vmatpush.msra.mxu0 %v679
        %1219 = vmatpush.msra.mxu0 %v675
        %1220 = vmatpush.msra.mxu0 %v671
        %1221 = vmatpush.msra.mxu0 %v667
        %1222 = vmatpush.msra.mxu0 %v663
        %1223 = vmatpush.msra.mxu0 %v659
        %1224 = vmatpush.msra.mxu0 %v655
        %1225 = vmatmul.f32.gmra.mxu0 %v1187
        %v1226 = vpop.f32.mrf.mxu0
        %v1227 = vadd.f32 0.0, %v1226
        %1228 = vdwg.mxu0
        %1229 = vmatpush.msra.mxu0 %v716
        %1230 = vmatpush.msra.mxu0 %v712
        %1231 = vmatpush.msra.mxu0 %v708
        %1232 = vmatpush.msra.mxu0 %v704
        %1233 = vmatpush.msra.mxu0 %v700
        %1234 = vmatpush.msra.mxu0 %v696
        %1235 = vmatpush.msra.mxu0 %v692
        %1236 = vmatpush.msra.mxu0 %v688
        %1237 = vmatpush.msra.mxu0 %v684
        %1238 = vmatpush.msra.mxu0 %v680
        %1239 = vmatpush.msra.mxu0 %v676
        %1240 = vmatpush.msra.mxu0 %v672
        %1241 = vmatpush.msra.mxu0 %v668
        %1242 = vmatpush.msra.mxu0 %v664
        %1243 = vmatpush.msra.mxu0 %v660
        %1244 = vmatpush.msra.mxu0 %v656
        %1245 = vmatmul.f32.gmra.mxu0 %v1187
        %v1246 = vpop.f32.mrf.mxu0
        %v1247 = vadd.f32 0.0, %v1246
        %1248 = vdwg.mxu0
        %1249 = vmatpush.msra.mxu0 %v717
        %1250 = vmatpush.msra.mxu0 %v713
        %1251 = vmatpush.msra.mxu0 %v709
        %1252 = vmatpush.msra.mxu0 %v705
        %1253 = vmatpush.msra.mxu0 %v701
        %1254 = vmatpush.msra.mxu0 %v697
        %1255 = vmatpush.msra.mxu0 %v693
        %1256 = vmatpush.msra.mxu0 %v689
        %1257 = vmatpush.msra.mxu0 %v685
        %1258 = vmatpush.msra.mxu0 %v681
        %1259 = vmatpush.msra.mxu0 %v677
        %1260 = vmatpush.msra.mxu0 %v673
        %1261 = vmatpush.msra.mxu0 %v669
        %1262 = vmatpush.msra.mxu0 %v665
        %1263 = vmatpush.msra.mxu0 %v661
        %1264 = vmatpush.msra.mxu0 %v657
        %1265 = vmatmul.f32.gmra.mxu0 %v1187
        %v1266 = vpop.f32.mrf.mxu0
        %v1267 = vadd.f32 0.0, %v1266
        %1268 = vdwg.mxu0
        %v1269 = vadd.f32 %v1160, %v1207
        %v1270 = vadd.f32 %v1161, %v1227
        %v1271 = vadd.f32 %v1162, %v1247
        %v1272 = vadd.f32 %v1163, %v1267
        %s1273 = scalar_lea.vmem [#allocation2], 20
        %v1274 = vld [vmem:[%s1273] sm:$0xf]
        %v1276 = vsel %vm536, %v1274, 0
        %1278 = vmatpush.msra.mxu0 0.0
        %1279 = vmatpush.msra.mxu0 0.0
        %1280 = vmatpush.msra.mxu0 0.0
        %1281 = vmatpush.msra.mxu0 0.0
        %1282 = vmatpush.msra.mxu0 0.0
        %1283 = vmatpush.msra.mxu0 0.0
        %1284 = vmatpush.msra.mxu0 0.0
        %1285 = vmatpush.msra.mxu0 0.0
        %1286 = vmatpush.msra.mxu0 0.0
        %1287 = vmatpush.msra.mxu0 0.0
        %1288 = vmatpush.msra.mxu0 0.0
        %1289 = vmatpush.msra.mxu0 0.0
        %1290 = vmatpush.msra.mxu0 0.0
        %1291 = vmatpush.msra.mxu0 0.0
        %1292 = vmatpush.msra.mxu0 0.0
        %1293 = vmatpush.msra.mxu0 %v1058
        %1294 = vmatmul.f32.gmra.mxu0 %v1276
        %v1295 = vpop.f32.mrf.mxu0
        %v1296 = vadd.f32 0.0, %v1295
        %1297 = vdwg.mxu0
        %1298 = vmatpush.msra.mxu0 %v964
        %1299 = vmatpush.msra.mxu0 %v960
        %1300 = vmatpush.msra.mxu0 %v956
        %1301 = vmatpush.msra.mxu0 %v952
        %1302 = vmatpush.msra.mxu0 %v948
        %1303 = vmatpush.msra.mxu0 %v944
        %1304 = vmatpush.msra.mxu0 %v940
        %1305 = vmatpush.msra.mxu0 %v936
        %1306 = vmatpush.msra.mxu0 %v932
        %1307 = vmatpush.msra.mxu0 %v928
        %1308 = vmatpush.msra.mxu0 %v924
        %1309 = vmatpush.msra.mxu0 %v920
        %1310 = vmatpush.msra.mxu0 %v916
        %1311 = vmatpush.msra.mxu0 %v912
        %1312 = vmatpush.msra.mxu0 %v908
        %1313 = vmatpush.msra.mxu0 %v904
        %1314 = vmatmul.f32.gmra.mxu0 %v1296
        %v1315 = vpop.f32.mrf.mxu0
        %v1316 = vadd.f32 0.0, %v1315
        %1317 = vdwg.mxu0
        %1318 = vmatpush.msra.mxu0 %v965
        %1319 = vmatpush.msra.mxu0 %v961
        %1320 = vmatpush.msra.mxu0 %v957
        %1321 = vmatpush.msra.mxu0 %v953
        %1322 = vmatpush.msra.mxu0 %v949
        %1323 = vmatpush.msra.mxu0 %v945
        %1324 = vmatpush.msra.mxu0 %v941
        %1325 = vmatpush.msra.mxu0 %v937
        %1326 = vmatpush.msra.mxu0 %v933
        %1327 = vmatpush.msra.mxu0 %v929
        %1328 = vmatpush.msra.mxu0 %v925
        %1329 = vmatpush.msra.mxu0 %v921
        %1330 = vmatpush.msra.mxu0 %v917
        %1331 = vmatpush.msra.mxu0 %v913
        %1332 = vmatpush.msra.mxu0 %v909
        %1333 = vmatpush.msra.mxu0 %v905
        %1334 = vmatmul.f32.gmra.mxu0 %v1296
        %v1335 = vpop.f32.mrf.mxu0
        %v1336 = vadd.f32 0.0, %v1335
        %1337 = vdwg.mxu0
        %1338 = vmatpush.msra.mxu0 %v966
        %1339 = vmatpush.msra.mxu0 %v962
        %1340 = vmatpush.msra.mxu0 %v958
        %1341 = vmatpush.msra.mxu0 %v954
        %1342 = vmatpush.msra.mxu0 %v950
        %1343 = vmatpush.msra.mxu0 %v946
        %1344 = vmatpush.msra.mxu0 %v942
        %1345 = vmatpush.msra.mxu0 %v938
        %1346 = vmatpush.msra.mxu0 %v934
        %1347 = vmatpush.msra.mxu0 %v930
        %1348 = vmatpush.msra.mxu0 %v926
        %1349 = vmatpush.msra.mxu0 %v922
        %1350 = vmatpush.msra.mxu0 %v918
        %1351 = vmatpush.msra.mxu0 %v914
        %1352 = vmatpush.msra.mxu0 %v910
        %1353 = vmatpush.msra.mxu0 %v906
        %1354 = vmatmul.f32.gmra.mxu0 %v1296
        %v1355 = vpop.f32.mrf.mxu0
        %v1356 = vadd.f32 0.0, %v1355
        %1357 = vdwg.mxu0
        %1358 = vmatpush.msra.mxu0 %v967
        %1359 = vmatpush.msra.mxu0 %v963
        %1360 = vmatpush.msra.mxu0 %v959
        %1361 = vmatpush.msra.mxu0 %v955
        %1362 = vmatpush.msra.mxu0 %v951
        %1363 = vmatpush.msra.mxu0 %v947
        %1364 = vmatpush.msra.mxu0 %v943
        %1365 = vmatpush.msra.mxu0 %v939
        %1366 = vmatpush.msra.mxu0 %v935
        %1367 = vmatpush.msra.mxu0 %v931
        %1368 = vmatpush.msra.mxu0 %v927
        %1369 = vmatpush.msra.mxu0 %v923
        %1370 = vmatpush.msra.mxu0 %v919
        %1371 = vmatpush.msra.mxu0 %v915
        %1372 = vmatpush.msra.mxu0 %v911
        %1373 = vmatpush.msra.mxu0 %v907
        %1374 = vmatmul.f32.gmra.mxu0 %v1296
        %v1375 = vpop.f32.mrf.mxu0
        %v1376 = vadd.f32 0.0, %v1375
        %1377 = vdwg.mxu0
        %v1378 = vadd.f32 %v1269, %v1316
        %v1379 = vadd.f32 %v1270, %v1336
        %v1380 = vadd.f32 %v1271, %v1356
        %v1381 = vadd.f32 %v1272, %v1376
        %s1382 = scalar_lea.vmem [#allocation2], 24
        %v1383 = vld [vmem:[%s1382] sm:$0xf]
        %v1385 = vsel %vm536, %v1383, 0
        %1387 = vmatpush.msra.mxu0 0.0
        %1388 = vmatpush.msra.mxu0 0.0
        %1389 = vmatpush.msra.mxu0 0.0
        %1390 = vmatpush.msra.mxu0 0.0
        %1391 = vmatpush.msra.mxu0 0.0
        %1392 = vmatpush.msra.mxu0 0.0
        %1393 = vmatpush.msra.mxu0 0.0
        %1394 = vmatpush.msra.mxu0 0.0
        %1395 = vmatpush.msra.mxu0 0.0
        %1396 = vmatpush.msra.mxu0 0.0
        %1397 = vmatpush.msra.mxu0 0.0
        %1398 = vmatpush.msra.mxu0 0.0
        %1399 = vmatpush.msra.mxu0 0.0
        %1400 = vmatpush.msra.mxu0 0.0
        %1401 = vmatpush.msra.mxu0 0.0
        %1402 = vmatpush.msra.mxu0 %v1058
        %1403 = vmatmul.f32.gmra.mxu0 %v1385
        %v1404 = vpop.f32.mrf.mxu0
        %v1405 = vadd.f32 0.0, %v1404
        %1406 = vdwg.mxu0
        %s1407 = scalar_lea.vmem [#allocation5], 1536
        %v1408 = vld [vmem:[%s1407] sm:$0xff]
        %v1409 = vld [vmem:[%s1407 + $0x8] sm:$0xff]
        %v1410 = vld [vmem:[%s1407 + $0x10] sm:$0xff]
        %v1411 = vld [vmem:[%s1407 + $0x18] sm:$0xff]
        %v1412 = vld [vmem:[%s1407 + $0x20] sm:$0xff]
        %v1413 = vld [vmem:[%s1407 + $0x28] sm:$0xff]
        %v1414 = vld [vmem:[%s1407 + $0x30] sm:$0xff]
        %v1415 = vld [vmem:[%s1407 + $0x38] sm:$0xff]
        %v1416 = vld [vmem:[%s1407 + $0x40] sm:$0xff]
        %v1417 = vld [vmem:[%s1407 + $0x48] sm:$0xff]
        %v1418 = vld [vmem:[%s1407 + $0x50] sm:$0xff]
        %v1419 = vld [vmem:[%s1407 + $0x58] sm:$0xff]
        %v1420 = vld [vmem:[%s1407 + $0x60] sm:$0xff]
        %v1421 = vld [vmem:[%s1407 + $0x68] sm:$0xff]
        %v1422 = vld [vmem:[%s1407 + $0x70] sm:$0xff]
        %v1423 = vld [vmem:[%s1407 + $0x78] sm:$0xff]
        %v1424 = vld [vmem:[%s1407 + $0x80] sm:$0xff]
        %v1425 = vld [vmem:[%s1407 + $0x88] sm:$0xff]
        %v1426 = vld [vmem:[%s1407 + $0x90] sm:$0xff]
        %v1427 = vld [vmem:[%s1407 + $0x98] sm:$0xff]
        %v1428 = vld [vmem:[%s1407 + $0xa0] sm:$0xff]
        %v1429 = vld [vmem:[%s1407 + $0xa8] sm:$0xff]
        %v1430 = vld [vmem:[%s1407 + $0xb0] sm:$0xff]
        %v1431 = vld [vmem:[%s1407 + $0xb8] sm:$0xff]
        %v1432 = vld [vmem:[%s1407 + $0xc0] sm:$0xff]
        %v1433 = vld [vmem:[%s1407 + $0xc8] sm:$0xff]
        %v1434 = vld [vmem:[%s1407 + $0xd0] sm:$0xff]
        %v1435 = vld [vmem:[%s1407 + $0xd8] sm:$0xff]
        %v1436 = vld [vmem:[%s1407 + $0xe0] sm:$0xff]
        %v1437 = vld [vmem:[%s1407 + $0xe8] sm:$0xff]
        %v1438 = vld [vmem:[%s1407 + $0xf0] sm:$0xff]
        %v1439 = vld [vmem:[%s1407 + $0xf8] sm:$0xff]
        %v1440 = vld [vmem:[%s1407 + $0x100] sm:$0xff]
        %v1441 = vld [vmem:[%s1407 + $0x108] sm:$0xff]
        %v1442 = vld [vmem:[%s1407 + $0x110] sm:$0xff]
        %v1443 = vld [vmem:[%s1407 + $0x118] sm:$0xff]
        %v1444 = vld [vmem:[%s1407 + $0x120] sm:$0xff]
        %v1445 = vld [vmem:[%s1407 + $0x128] sm:$0xff]
        %v1446 = vld [vmem:[%s1407 + $0x130] sm:$0xff]
        %v1447 = vld [vmem:[%s1407 + $0x138] sm:$0xff]
        %v1448 = vld [vmem:[%s1407 + $0x140] sm:$0xff]
        %v1449 = vld [vmem:[%s1407 + $0x148] sm:$0xff]
        %v1450 = vld [vmem:[%s1407 + $0x150] sm:$0xff]
        %v1451 = vld [vmem:[%s1407 + $0x158] sm:$0xff]
        %v1452 = vld [vmem:[%s1407 + $0x160] sm:$0xff]
        %v1453 = vld [vmem:[%s1407 + $0x168] sm:$0xff]
        %v1454 = vld [vmem:[%s1407 + $0x170] sm:$0xff]
        %v1455 = vld [vmem:[%s1407 + $0x178] sm:$0xff]
        %v1456 = vld [vmem:[%s1407 + $0x180] sm:$0xff]
        %v1457 = vld [vmem:[%s1407 + $0x188] sm:$0xff]
        %v1458 = vld [vmem:[%s1407 + $0x190] sm:$0xff]
        %v1459 = vld [vmem:[%s1407 + $0x198] sm:$0xff]
        %v1460 = vld [vmem:[%s1407 + $0x1a0] sm:$0xff]
        %v1461 = vld [vmem:[%s1407 + $0x1a8] sm:$0xff]
        %v1462 = vld [vmem:[%s1407 + $0x1b0] sm:$0xff]
        %v1463 = vld [vmem:[%s1407 + $0x1b8] sm:$0xff]
        %v1464 = vld [vmem:[%s1407 + $0x1c0] sm:$0xff]
        %v1465 = vld [vmem:[%s1407 + $0x1c8] sm:$0xff]
        %v1466 = vld [vmem:[%s1407 + $0x1d0] sm:$0xff]
        %v1467 = vld [vmem:[%s1407 + $0x1d8] sm:$0xff]
        %v1468 = vld [vmem:[%s1407 + $0x1e0] sm:$0xff]
        %v1469 = vld [vmem:[%s1407 + $0x1e8] sm:$0xff]
        %v1470 = vld [vmem:[%s1407 + $0x1f0] sm:$0xff]
        %v1471 = vld [vmem:[%s1407 + $0x1f8] sm:$0xff]
        %1472 = vmatpush.msra.mxu0 %v1468
        %1473 = vmatpush.msra.mxu0 %v1464
        %1474 = vmatpush.msra.mxu0 %v1460
        %1475 = vmatpush.msra.mxu0 %v1456
        %1476 = vmatpush.msra.mxu0 %v1452
        %1477 = vmatpush.msra.mxu0 %v1448
        %1478 = vmatpush.msra.mxu0 %v1444
        %1479 = vmatpush.msra.mxu0 %v1440
        %1480 = vmatpush.msra.mxu0 %v1436
        %1481 = vmatpush.msra.mxu0 %v1432
        %1482 = vmatpush.msra.mxu0 %v1428
        %1483 = vmatpush.msra.mxu0 %v1424
        %1484 = vmatpush.msra.mxu0 %v1420
        %1485 = vmatpush.msra.mxu0 %v1416
        %1486 = vmatpush.msra.mxu0 %v1412
        %1487 = vmatpush.msra.mxu0 %v1408
        %1488 = vmatmul.f32.gmra.mxu0 %v1405
        %v1489 = vpop.f32.mrf.mxu0
        %v1490 = vadd.f32 0.0, %v1489
        %1491 = vdwg.mxu0
        %1492 = vmatpush.msra.mxu0 %v1469
        %1493 = vmatpush.msra.mxu0 %v1465
        %1494 = vmatpush.msra.mxu0 %v1461
        %1495 = vmatpush.msra.mxu0 %v1457
        %1496 = vmatpush.msra.mxu0 %v1453
        %1497 = vmatpush.msra.mxu0 %v1449
        %1498 = vmatpush.msra.mxu0 %v1445
        %1499 = vmatpush.msra.mxu0 %v1441
        %1500 = vmatpush.msra.mxu0 %v1437
        %1501 = vmatpush.msra.mxu0 %v1433
        %1502 = vmatpush.msra.mxu0 %v1429
        %1503 = vmatpush.msra.mxu0 %v1425
        %1504 = vmatpush.msra.mxu0 %v1421
        %1505 = vmatpush.msra.mxu0 %v1417
        %1506 = vmatpush.msra.mxu0 %v1413
        %1507 = vmatpush.msra.mxu0 %v1409
        %1508 = vmatmul.f32.gmra.mxu0 %v1405
        %v1509 = vpop.f32.mrf.mxu0
        %v1510 = vadd.f32 0.0, %v1509
        %1511 = vdwg.mxu0
        %1512 = vmatpush.msra.mxu0 %v1470
        %1513 = vmatpush.msra.mxu0 %v1466
        %1514 = vmatpush.msra.mxu0 %v1462
        %1515 = vmatpush.msra.mxu0 %v1458
        %1516 = vmatpush.msra.mxu0 %v1454
        %1517 = vmatpush.msra.mxu0 %v1450
        %1518 = vmatpush.msra.mxu0 %v1446
        %1519 = vmatpush.msra.mxu0 %v1442
        %1520 = vmatpush.msra.mxu0 %v1438
        %1521 = vmatpush.msra.mxu0 %v1434
        %1522 = vmatpush.msra.mxu0 %v1430
        %1523 = vmatpush.msra.mxu0 %v1426
        %1524 = vmatpush.msra.mxu0 %v1422
        %1525 = vmatpush.msra.mxu0 %v1418
        %1526 = vmatpush.msra.mxu0 %v1414
        %1527 = vmatpush.msra.mxu0 %v1410
        %1528 = vmatmul.f32.gmra.mxu0 %v1405
        %v1529 = vpop.f32.mrf.mxu0
        %v1530 = vadd.f32 0.0, %v1529
        %1531 = vdwg.mxu0
        %1532 = vmatpush.msra.mxu0 %v1471
        %1533 = vmatpush.msra.mxu0 %v1467
        %1534 = vmatpush.msra.mxu0 %v1463
        %1535 = vmatpush.msra.mxu0 %v1459
        %1536 = vmatpush.msra.mxu0 %v1455
        %1537 = vmatpush.msra.mxu0 %v1451
        %1538 = vmatpush.msra.mxu0 %v1447
        %1539 = vmatpush.msra.mxu0 %v1443
        %1540 = vmatpush.msra.mxu0 %v1439
        %1541 = vmatpush.msra.mxu0 %v1435
        %1542 = vmatpush.msra.mxu0 %v1431
        %1543 = vmatpush.msra.mxu0 %v1427
        %1544 = vmatpush.msra.mxu0 %v1423
        %1545 = vmatpush.msra.mxu0 %v1419
        %1546 = vmatpush.msra.mxu0 %v1415
        %1547 = vmatpush.msra.mxu0 %v1411
        %1548 = vmatmul.f32.gmra.mxu0 %v1405
        %v1549 = vpop.f32.mrf.mxu0
        %v1550 = vadd.f32 0.0, %v1549
        %1551 = vdwg.mxu0
        %v1552 = vadd.f32 %v1378, %v1490
        %v1553 = vadd.f32 %v1379, %v1510
        %v1554 = vadd.f32 %v1380, %v1530
        %v1555 = vadd.f32 %v1381, %v1550
        %s1556 = scalar_lea.vmem [#allocation2], 28
        %v1557 = vld [vmem:[%s1556] sm:$0xf]
        %v1559 = vsel %vm536, %v1557, 0
        %1561 = vmatpush.msra.mxu0 0.0
        %1562 = vmatpush.msra.mxu0 0.0
        %1563 = vmatpush.msra.mxu0 0.0
        %1564 = vmatpush.msra.mxu0 0.0
        %1565 = vmatpush.msra.mxu0 0.0
        %1566 = vmatpush.msra.mxu0 0.0
        %1567 = vmatpush.msra.mxu0 0.0
        %1568 = vmatpush.msra.mxu0 0.0
        %1569 = vmatpush.msra.mxu0 0.0
        %1570 = vmatpush.msra.mxu0 0.0
        %1571 = vmatpush.msra.mxu0 0.0
        %1572 = vmatpush.msra.mxu0 0.0
        %1573 = vmatpush.msra.mxu0 0.0
        %1574 = vmatpush.msra.mxu0 0.0
        %1575 = vmatpush.msra.mxu0 0.0
        %1576 = vmatpush.msra.mxu0 %v1058
        %1577 = vmatmul.f32.gmra.mxu0 %v1559
        %v1578 = vpop.f32.mrf.mxu0
        %v1579 = vadd.f32 0.0, %v1578
        %1580 = vdwg.mxu0
        %s1581 = scalar_lea.vmem [#allocation5], 2048
        %v1582 = vld [vmem:[%s1581] sm:$0xff]
        %v1583 = vld [vmem:[%s1581 + $0x8] sm:$0xff]
        %v1584 = vld [vmem:[%s1581 + $0x10] sm:$0xff]
        %v1585 = vld [vmem:[%s1581 + $0x18] sm:$0xff]
        %v1586 = vld [vmem:[%s1581 + $0x20] sm:$0xff]
        %v1587 = vld [vmem:[%s1581 + $0x28] sm:$0xff]
        %v1588 = vld [vmem:[%s1581 + $0x30] sm:$0xff]
        %v1589 = vld [vmem:[%s1581 + $0x38] sm:$0xff]
        %v1590 = vld [vmem:[%s1581 + $0x40] sm:$0xff]
        %v1591 = vld [vmem:[%s1581 + $0x48] sm:$0xff]
        %v1592 = vld [vmem:[%s1581 + $0x50] sm:$0xff]
        %v1593 = vld [vmem:[%s1581 + $0x58] sm:$0xff]
        %v1594 = vld [vmem:[%s1581 + $0x60] sm:$0xff]
        %v1595 = vld [vmem:[%s1581 + $0x68] sm:$0xff]
        %v1596 = vld [vmem:[%s1581 + $0x70] sm:$0xff]
        %v1597 = vld [vmem:[%s1581 + $0x78] sm:$0xff]
        %v1598 = vld [vmem:[%s1581 + $0x80] sm:$0xff]
        %v1599 = vld [vmem:[%s1581 + $0x88] sm:$0xff]
        %v1600 = vld [vmem:[%s1581 + $0x90] sm:$0xff]
        %v1601 = vld [vmem:[%s1581 + $0x98] sm:$0xff]
        %v1602 = vld [vmem:[%s1581 + $0xa0] sm:$0xff]
        %v1603 = vld [vmem:[%s1581 + $0xa8] sm:$0xff]
        %v1604 = vld [vmem:[%s1581 + $0xb0] sm:$0xff]
        %v1605 = vld [vmem:[%s1581 + $0xb8] sm:$0xff]
        %v1606 = vld [vmem:[%s1581 + $0xc0] sm:$0xff]
        %v1607 = vld [vmem:[%s1581 + $0xc8] sm:$0xff]
        %v1608 = vld [vmem:[%s1581 + $0xd0] sm:$0xff]
        %v1609 = vld [vmem:[%s1581 + $0xd8] sm:$0xff]
        %v1610 = vld [vmem:[%s1581 + $0xe0] sm:$0xff]
        %v1611 = vld [vmem:[%s1581 + $0xe8] sm:$0xff]
        %v1612 = vld [vmem:[%s1581 + $0xf0] sm:$0xff]
        %v1613 = vld [vmem:[%s1581 + $0xf8] sm:$0xff]
        %v1614 = vld [vmem:[%s1581 + $0x100] sm:$0xff]
        %v1615 = vld [vmem:[%s1581 + $0x108] sm:$0xff]
        %v1616 = vld [vmem:[%s1581 + $0x110] sm:$0xff]
        %v1617 = vld [vmem:[%s1581 + $0x118] sm:$0xff]
        %v1618 = vld [vmem:[%s1581 + $0x120] sm:$0xff]
        %v1619 = vld [vmem:[%s1581 + $0x128] sm:$0xff]
        %v1620 = vld [vmem:[%s1581 + $0x130] sm:$0xff]
        %v1621 = vld [vmem:[%s1581 + $0x138] sm:$0xff]
        %v1622 = vld [vmem:[%s1581 + $0x140] sm:$0xff]
        %v1623 = vld [vmem:[%s1581 + $0x148] sm:$0xff]
        %v1624 = vld [vmem:[%s1581 + $0x150] sm:$0xff]
        %v1625 = vld [vmem:[%s1581 + $0x158] sm:$0xff]
        %v1626 = vld [vmem:[%s1581 + $0x160] sm:$0xff]
        %v1627 = vld [vmem:[%s1581 + $0x168] sm:$0xff]
        %v1628 = vld [vmem:[%s1581 + $0x170] sm:$0xff]
        %v1629 = vld [vmem:[%s1581 + $0x178] sm:$0xff]
        %v1630 = vld [vmem:[%s1581 + $0x180] sm:$0xff]
        %v1631 = vld [vmem:[%s1581 + $0x188] sm:$0xff]
        %v1632 = vld [vmem:[%s1581 + $0x190] sm:$0xff]
        %v1633 = vld [vmem:[%s1581 + $0x198] sm:$0xff]
        %v1634 = vld [vmem:[%s1581 + $0x1a0] sm:$0xff]
        %v1635 = vld [vmem:[%s1581 + $0x1a8] sm:$0xff]
        %v1636 = vld [vmem:[%s1581 + $0x1b0] sm:$0xff]
        %v1637 = vld [vmem:[%s1581 + $0x1b8] sm:$0xff]
        %v1638 = vld [vmem:[%s1581 + $0x1c0] sm:$0xff]
        %v1639 = vld [vmem:[%s1581 + $0x1c8] sm:$0xff]
        %v1640 = vld [vmem:[%s1581 + $0x1d0] sm:$0xff]
        %v1641 = vld [vmem:[%s1581 + $0x1d8] sm:$0xff]
        %v1642 = vld [vmem:[%s1581 + $0x1e0] sm:$0xff]
        %v1643 = vld [vmem:[%s1581 + $0x1e8] sm:$0xff]
        %v1644 = vld [vmem:[%s1581 + $0x1f0] sm:$0xff]
        %v1645 = vld [vmem:[%s1581 + $0x1f8] sm:$0xff]
        %1646 = vmatpush.msra.mxu0 %v1642
        %1647 = vmatpush.msra.mxu0 %v1638
        %1648 = vmatpush.msra.mxu0 %v1634
        %1649 = vmatpush.msra.mxu0 %v1630
        %1650 = vmatpush.msra.mxu0 %v1626
        %1651 = vmatpush.msra.mxu0 %v1622
        %1652 = vmatpush.msra.mxu0 %v1618
        %1653 = vmatpush.msra.mxu0 %v1614
        %1654 = vmatpush.msra.mxu0 %v1610
        %1655 = vmatpush.msra.mxu0 %v1606
        %1656 = vmatpush.msra.mxu0 %v1602
        %1657 = vmatpush.msra.mxu0 %v1598
        %1658 = vmatpush.msra.mxu0 %v1594
        %1659 = vmatpush.msra.mxu0 %v1590
        %1660 = vmatpush.msra.mxu0 %v1586
        %1661 = vmatpush.msra.mxu0 %v1582
        %1662 = vmatmul.f32.gmra.mxu0 %v1579
        %v1663 = vpop.f32.mrf.mxu0
        %v1664 = vadd.f32 0.0, %v1663
        %1665 = vdwg.mxu0
        %1666 = vmatpush.msra.mxu0 %v1643
        %1667 = vmatpush.msra.mxu0 %v1639
        %1668 = vmatpush.msra.mxu0 %v1635
        %1669 = vmatpush.msra.mxu0 %v1631
        %1670 = vmatpush.msra.mxu0 %v1627
        %1671 = vmatpush.msra.mxu0 %v1623
        %1672 = vmatpush.msra.mxu0 %v1619
        %1673 = vmatpush.msra.mxu0 %v1615
        %1674 = vmatpush.msra.mxu0 %v1611
        %1675 = vmatpush.msra.mxu0 %v1607
        %1676 = vmatpush.msra.mxu0 %v1603
        %1677 = vmatpush.msra.mxu0 %v1599
        %1678 = vmatpush.msra.mxu0 %v1595
        %1679 = vmatpush.msra.mxu0 %v1591
        %1680 = vmatpush.msra.mxu0 %v1587
        %1681 = vmatpush.msra.mxu0 %v1583
        %1682 = vmatmul.f32.gmra.mxu0 %v1579
        %v1683 = vpop.f32.mrf.mxu0
        %v1684 = vadd.f32 0.0, %v1683
        %1685 = vdwg.mxu0
        %1686 = vmatpush.msra.mxu0 %v1644
        %1687 = vmatpush.msra.mxu0 %v1640
        %1688 = vmatpush.msra.mxu0 %v1636
        %1689 = vmatpush.msra.mxu0 %v1632
        %1690 = vmatpush.msra.mxu0 %v1628
        %1691 = vmatpush.msra.mxu0 %v1624
        %1692 = vmatpush.msra.mxu0 %v1620
        %1693 = vmatpush.msra.mxu0 %v1616
        %1694 = vmatpush.msra.mxu0 %v1612
        %1695 = vmatpush.msra.mxu0 %v1608
        %1696 = vmatpush.msra.mxu0 %v1604
        %1697 = vmatpush.msra.mxu0 %v1600
        %1698 = vmatpush.msra.mxu0 %v1596
        %1699 = vmatpush.msra.mxu0 %v1592
        %1700 = vmatpush.msra.mxu0 %v1588
        %1701 = vmatpush.msra.mxu0 %v1584
        %1702 = vmatmul.f32.gmra.mxu0 %v1579
        %v1703 = vpop.f32.mrf.mxu0
        %v1704 = vadd.f32 0.0, %v1703
        %1705 = vdwg.mxu0
        %1706 = vmatpush.msra.mxu0 %v1645
        %1707 = vmatpush.msra.mxu0 %v1641
        %1708 = vmatpush.msra.mxu0 %v1637
        %1709 = vmatpush.msra.mxu0 %v1633
        %1710 = vmatpush.msra.mxu0 %v1629
        %1711 = vmatpush.msra.mxu0 %v1625
        %1712 = vmatpush.msra.mxu0 %v1621
        %1713 = vmatpush.msra.mxu0 %v1617
        %1714 = vmatpush.msra.mxu0 %v1613
        %1715 = vmatpush.msra.mxu0 %v1609
        %1716 = vmatpush.msra.mxu0 %v1605
        %1717 = vmatpush.msra.mxu0 %v1601
        %1718 = vmatpush.msra.mxu0 %v1597
        %1719 = vmatpush.msra.mxu0 %v1593
        %1720 = vmatpush.msra.mxu0 %v1589
        %1721 = vmatpush.msra.mxu0 %v1585
        %1722 = vmatmul.f32.gmra.mxu0 %v1579
        %v1723 = vpop.f32.mrf.mxu0
        %v1724 = vadd.f32 0.0, %v1723
        %1725 = vdwg.mxu0
        %v1726 = vadd.f32 %v1552, %v1664
        %v1727 = vadd.f32 %v1553, %v1684
        %v1728 = vadd.f32 %v1554, %v1704
        %v1729 = vadd.f32 %v1555, %v1724
        %s1730 = scalar_lea.vmem [#allocation2], 32
        %v1731 = vld [vmem:[%s1730] sm:$0xf]
        %v1733 = vsel %vm536, %v1731, 0
        %1735 = vmatpush.msra.mxu0 0.0
        %1736 = vmatpush.msra.mxu0 0.0
        %1737 = vmatpush.msra.mxu0 0.0
        %1738 = vmatpush.msra.mxu0 0.0
        %1739 = vmatpush.msra.mxu0 0.0
        %1740 = vmatpush.msra.mxu0 0.0
        %1741 = vmatpush.msra.mxu0 0.0
        %1742 = vmatpush.msra.mxu0 0.0
        %1743 = vmatpush.msra.mxu0 0.0
        %1744 = vmatpush.msra.mxu0 0.0
        %1745 = vmatpush.msra.mxu0 0.0
        %1746 = vmatpush.msra.mxu0 0.0
        %1747 = vmatpush.msra.mxu0 0.0
        %1748 = vmatpush.msra.mxu0 0.0
        %1749 = vmatpush.msra.mxu0 0.0
        %1750 = vmatpush.msra.mxu0 %v1058
        %1751 = vmatmul.f32.gmra.mxu0 %v1733
        %v1752 = vpop.f32.mrf.mxu0
        %v1753 = vadd.f32 0.0, %v1752
        %1754 = vdwg.mxu0
        %s1755 = scalar_lea.vmem [#allocation5], 2560
        %v1756 = vld [vmem:[%s1755] sm:$0xff]
        %v1757 = vld [vmem:[%s1755 + $0x8] sm:$0xff]
        %v1758 = vld [vmem:[%s1755 + $0x10] sm:$0xff]
        %v1759 = vld [vmem:[%s1755 + $0x18] sm:$0xff]
        %v1760 = vld [vmem:[%s1755 + $0x20] sm:$0xff]
        %v1761 = vld [vmem:[%s1755 + $0x28] sm:$0xff]
        %v1762 = vld [vmem:[%s1755 + $0x30] sm:$0xff]
        %v1763 = vld [vmem:[%s1755 + $0x38] sm:$0xff]
        %v1764 = vld [vmem:[%s1755 + $0x40] sm:$0xff]
        %v1765 = vld [vmem:[%s1755 + $0x48] sm:$0xff]
        %v1766 = vld [vmem:[%s1755 + $0x50] sm:$0xff]
        %v1767 = vld [vmem:[%s1755 + $0x58] sm:$0xff]
        %v1768 = vld [vmem:[%s1755 + $0x60] sm:$0xff]
        %v1769 = vld [vmem:[%s1755 + $0x68] sm:$0xff]
        %v1770 = vld [vmem:[%s1755 + $0x70] sm:$0xff]
        %v1771 = vld [vmem:[%s1755 + $0x78] sm:$0xff]
        %v1772 = vld [vmem:[%s1755 + $0x80] sm:$0xff]
        %v1773 = vld [vmem:[%s1755 + $0x88] sm:$0xff]
        %v1774 = vld [vmem:[%s1755 + $0x90] sm:$0xff]
        %v1775 = vld [vmem:[%s1755 + $0x98] sm:$0xff]
        %v1776 = vld [vmem:[%s1755 + $0xa0] sm:$0xff]
        %v1777 = vld [vmem:[%s1755 + $0xa8] sm:$0xff]
        %v1778 = vld [vmem:[%s1755 + $0xb0] sm:$0xff]
        %v1779 = vld [vmem:[%s1755 + $0xb8] sm:$0xff]
        %v1780 = vld [vmem:[%s1755 + $0xc0] sm:$0xff]
        %v1781 = vld [vmem:[%s1755 + $0xc8] sm:$0xff]
        %v1782 = vld [vmem:[%s1755 + $0xd0] sm:$0xff]
        %v1783 = vld [vmem:[%s1755 + $0xd8] sm:$0xff]
        %v1784 = vld [vmem:[%s1755 + $0xe0] sm:$0xff]
        %v1785 = vld [vmem:[%s1755 + $0xe8] sm:$0xff]
        %v1786 = vld [vmem:[%s1755 + $0xf0] sm:$0xff]
        %v1787 = vld [vmem:[%s1755 + $0xf8] sm:$0xff]
        %v1788 = vld [vmem:[%s1755 + $0x100] sm:$0xff]
        %v1789 = vld [vmem:[%s1755 + $0x108] sm:$0xff]
        %v1790 = vld [vmem:[%s1755 + $0x110] sm:$0xff]
        %v1791 = vld [vmem:[%s1755 + $0x118] sm:$0xff]
        %v1792 = vld [vmem:[%s1755 + $0x120] sm:$0xff]
        %v1793 = vld [vmem:[%s1755 + $0x128] sm:$0xff]
        %v1794 = vld [vmem:[%s1755 + $0x130] sm:$0xff]
        %v1795 = vld [vmem:[%s1755 + $0x138] sm:$0xff]
        %v1796 = vld [vmem:[%s1755 + $0x140] sm:$0xff]
        %v1797 = vld [vmem:[%s1755 + $0x148] sm:$0xff]
        %v1798 = vld [vmem:[%s1755 + $0x150] sm:$0xff]
        %v1799 = vld [vmem:[%s1755 + $0x158] sm:$0xff]
        %v1800 = vld [vmem:[%s1755 + $0x160] sm:$0xff]
        %v1801 = vld [vmem:[%s1755 + $0x168] sm:$0xff]
        %v1802 = vld [vmem:[%s1755 + $0x170] sm:$0xff]
        %v1803 = vld [vmem:[%s1755 + $0x178] sm:$0xff]
        %v1804 = vld [vmem:[%s1755 + $0x180] sm:$0xff]
        %v1805 = vld [vmem:[%s1755 + $0x188] sm:$0xff]
        %v1806 = vld [vmem:[%s1755 + $0x190] sm:$0xff]
        %v1807 = vld [vmem:[%s1755 + $0x198] sm:$0xff]
        %v1808 = vld [vmem:[%s1755 + $0x1a0] sm:$0xff]
        %v1809 = vld [vmem:[%s1755 + $0x1a8] sm:$0xff]
        %v1810 = vld [vmem:[%s1755 + $0x1b0] sm:$0xff]
        %v1811 = vld [vmem:[%s1755 + $0x1b8] sm:$0xff]
        %v1812 = vld [vmem:[%s1755 + $0x1c0] sm:$0xff]
        %v1813 = vld [vmem:[%s1755 + $0x1c8] sm:$0xff]
        %v1814 = vld [vmem:[%s1755 + $0x1d0] sm:$0xff]
        %v1815 = vld [vmem:[%s1755 + $0x1d8] sm:$0xff]
        %v1816 = vld [vmem:[%s1755 + $0x1e0] sm:$0xff]
        %v1817 = vld [vmem:[%s1755 + $0x1e8] sm:$0xff]
        %v1818 = vld [vmem:[%s1755 + $0x1f0] sm:$0xff]
        %v1819 = vld [vmem:[%s1755 + $0x1f8] sm:$0xff]
        %1820 = vmatpush.msra.mxu0 %v1816
        %1821 = vmatpush.msra.mxu0 %v1812
        %1822 = vmatpush.msra.mxu0 %v1808
        %1823 = vmatpush.msra.mxu0 %v1804
        %1824 = vmatpush.msra.mxu0 %v1800
        %1825 = vmatpush.msra.mxu0 %v1796
        %1826 = vmatpush.msra.mxu0 %v1792
        %1827 = vmatpush.msra.mxu0 %v1788
        %1828 = vmatpush.msra.mxu0 %v1784
        %1829 = vmatpush.msra.mxu0 %v1780
        %1830 = vmatpush.msra.mxu0 %v1776
        %1831 = vmatpush.msra.mxu0 %v1772
        %1832 = vmatpush.msra.mxu0 %v1768
        %1833 = vmatpush.msra.mxu0 %v1764
        %1834 = vmatpush.msra.mxu0 %v1760
        %1835 = vmatpush.msra.mxu0 %v1756
        %1836 = vmatmul.f32.gmra.mxu0 %v1753
        %v1837 = vpop.f32.mrf.mxu0
        %v1838 = vadd.f32 0.0, %v1837
        %1839 = vdwg.mxu0
        %1840 = vmatpush.msra.mxu0 %v1817
        %1841 = vmatpush.msra.mxu0 %v1813
        %1842 = vmatpush.msra.mxu0 %v1809
        %1843 = vmatpush.msra.mxu0 %v1805
        %1844 = vmatpush.msra.mxu0 %v1801
        %1845 = vmatpush.msra.mxu0 %v1797
        %1846 = vmatpush.msra.mxu0 %v1793
        %1847 = vmatpush.msra.mxu0 %v1789
        %1848 = vmatpush.msra.mxu0 %v1785
        %1849 = vmatpush.msra.mxu0 %v1781
        %1850 = vmatpush.msra.mxu0 %v1777
        %1851 = vmatpush.msra.mxu0 %v1773
        %1852 = vmatpush.msra.mxu0 %v1769
        %1853 = vmatpush.msra.mxu0 %v1765
        %1854 = vmatpush.msra.mxu0 %v1761
        %1855 = vmatpush.msra.mxu0 %v1757
        %1856 = vmatmul.f32.gmra.mxu0 %v1753
        %v1857 = vpop.f32.mrf.mxu0
        %v1858 = vadd.f32 0.0, %v1857
        %1859 = vdwg.mxu0
        %1860 = vmatpush.msra.mxu0 %v1818
        %1861 = vmatpush.msra.mxu0 %v1814
        %1862 = vmatpush.msra.mxu0 %v1810
        %1863 = vmatpush.msra.mxu0 %v1806
        %1864 = vmatpush.msra.mxu0 %v1802
        %1865 = vmatpush.msra.mxu0 %v1798
        %1866 = vmatpush.msra.mxu0 %v1794
        %1867 = vmatpush.msra.mxu0 %v1790
        %1868 = vmatpush.msra.mxu0 %v1786
        %1869 = vmatpush.msra.mxu0 %v1782
        %1870 = vmatpush.msra.mxu0 %v1778
        %1871 = vmatpush.msra.mxu0 %v1774
        %1872 = vmatpush.msra.mxu0 %v1770
        %1873 = vmatpush.msra.mxu0 %v1766
        %1874 = vmatpush.msra.mxu0 %v1762
        %1875 = vmatpush.msra.mxu0 %v1758
        %1876 = vmatmul.f32.gmra.mxu0 %v1753
        %v1877 = vpop.f32.mrf.mxu0
        %v1878 = vadd.f32 0.0, %v1877
        %1879 = vdwg.mxu0
        %1880 = vmatpush.msra.mxu0 %v1819
        %1881 = vmatpush.msra.mxu0 %v1815
        %1882 = vmatpush.msra.mxu0 %v1811
        %1883 = vmatpush.msra.mxu0 %v1807
        %1884 = vmatpush.msra.mxu0 %v1803
        %1885 = vmatpush.msra.mxu0 %v1799
        %1886 = vmatpush.msra.mxu0 %v1795
        %1887 = vmatpush.msra.mxu0 %v1791
        %1888 = vmatpush.msra.mxu0 %v1787
        %1889 = vmatpush.msra.mxu0 %v1783
        %1890 = vmatpush.msra.mxu0 %v1779
        %1891 = vmatpush.msra.mxu0 %v1775
        %1892 = vmatpush.msra.mxu0 %v1771
        %1893 = vmatpush.msra.mxu0 %v1767
        %1894 = vmatpush.msra.mxu0 %v1763
        %1895 = vmatpush.msra.mxu0 %v1759
        %1896 = vmatmul.f32.gmra.mxu0 %v1753
        %v1897 = vpop.f32.mrf.mxu0
        %v1898 = vadd.f32 0.0, %v1897
        %1899 = vdwg.mxu0
        %v1900 = vadd.f32 %v1726, %v1838
        %v1901 = vadd.f32 %v1727, %v1858
        %v1902 = vadd.f32 %v1728, %v1878
        %v1903 = vadd.f32 %v1729, %v1898
        %s1904 = scalar_lea.vmem [#allocation2], 36
        %v1905 = vld [vmem:[%s1904] sm:$0xf]
        %v1907 = vsel %vm536, %v1905, 0
        %v1910 = vsel %vm540, %v534, 0
        %1912 = vmatpush.msra.mxu0 0.0
        %1913 = vmatpush.msra.mxu0 0.0
        %1914 = vmatpush.msra.mxu0 0.0
        %1915 = vmatpush.msra.mxu0 0.0
        %1916 = vmatpush.msra.mxu0 0.0
        %1917 = vmatpush.msra.mxu0 0.0
        %1918 = vmatpush.msra.mxu0 0.0
        %1919 = vmatpush.msra.mxu0 0.0
        %1920 = vmatpush.msra.mxu0 0.0
        %1921 = vmatpush.msra.mxu0 0.0
        %1922 = vmatpush.msra.mxu0 0.0
        %1923 = vmatpush.msra.mxu0 0.0
        %1924 = vmatpush.msra.mxu0 0.0
        %1925 = vmatpush.msra.mxu0 0.0
        %1926 = vmatpush.msra.mxu0 0.0
        %1927 = vmatpush.msra.mxu0 %v1910
        %1928 = vmatmul.f32.gmra.mxu0 %v1907
        %v1929 = vpop.f32.mrf.mxu0
        %v1930 = vadd.f32 0.0, %v1929
        %1931 = vdwg.mxu0
        %1932 = vmatpush.msra.mxu0 %v1468
        %1933 = vmatpush.msra.mxu0 %v1464
        %1934 = vmatpush.msra.mxu0 %v1460
        %1935 = vmatpush.msra.mxu0 %v1456
        %1936 = vmatpush.msra.mxu0 %v1452
        %1937 = vmatpush.msra.mxu0 %v1448
        %1938 = vmatpush.msra.mxu0 %v1444
        %1939 = vmatpush.msra.mxu0 %v1440
        %1940 = vmatpush.msra.mxu0 %v1436
        %1941 = vmatpush.msra.mxu0 %v1432
        %1942 = vmatpush.msra.mxu0 %v1428
        %1943 = vmatpush.msra.mxu0 %v1424
        %1944 = vmatpush.msra.mxu0 %v1420
        %1945 = vmatpush.msra.mxu0 %v1416
        %1946 = vmatpush.msra.mxu0 %v1412
        %1947 = vmatpush.msra.mxu0 %v1408
        %1948 = vmatmul.f32.gmra.mxu0 %v1930
        %v1949 = vpop.f32.mrf.mxu0
        %v1950 = vadd.f32 0.0, %v1949
        %1951 = vdwg.mxu0
        %1952 = vmatpush.msra.mxu0 %v1469
        %1953 = vmatpush.msra.mxu0 %v1465
        %1954 = vmatpush.msra.mxu0 %v1461
        %1955 = vmatpush.msra.mxu0 %v1457
        %1956 = vmatpush.msra.mxu0 %v1453
        %1957 = vmatpush.msra.mxu0 %v1449
        %1958 = vmatpush.msra.mxu0 %v1445
        %1959 = vmatpush.msra.mxu0 %v1441
        %1960 = vmatpush.msra.mxu0 %v1437
        %1961 = vmatpush.msra.mxu0 %v1433
        %1962 = vmatpush.msra.mxu0 %v1429
        %1963 = vmatpush.msra.mxu0 %v1425
        %1964 = vmatpush.msra.mxu0 %v1421
        %1965 = vmatpush.msra.mxu0 %v1417
        %1966 = vmatpush.msra.mxu0 %v1413
        %1967 = vmatpush.msra.mxu0 %v1409
        %1968 = vmatmul.f32.gmra.mxu0 %v1930
        %v1969 = vpop.f32.mrf.mxu0
        %v1970 = vadd.f32 0.0, %v1969
        %1971 = vdwg.mxu0
        %1972 = vmatpush.msra.mxu0 %v1470
        %1973 = vmatpush.msra.mxu0 %v1466
        %1974 = vmatpush.msra.mxu0 %v1462
        %1975 = vmatpush.msra.mxu0 %v1458
        %1976 = vmatpush.msra.mxu0 %v1454
        %1977 = vmatpush.msra.mxu0 %v1450
        %1978 = vmatpush.msra.mxu0 %v1446
        %1979 = vmatpush.msra.mxu0 %v1442
        %1980 = vmatpush.msra.mxu0 %v1438
        %1981 = vmatpush.msra.mxu0 %v1434
        %1982 = vmatpush.msra.mxu0 %v1430
        %1983 = vmatpush.msra.mxu0 %v1426
        %1984 = vmatpush.msra.mxu0 %v1422
        %1985 = vmatpush.msra.mxu0 %v1418
        %1986 = vmatpush.msra.mxu0 %v1414
        %1987 = vmatpush.msra.mxu0 %v1410
        %1988 = vmatmul.f32.gmra.mxu0 %v1930
        %v1989 = vpop.f32.mrf.mxu0
        %v1990 = vadd.f32 0.0, %v1989
        %1991 = vdwg.mxu0
        %1992 = vmatpush.msra.mxu0 %v1471
        %1993 = vmatpush.msra.mxu0 %v1467
        %1994 = vmatpush.msra.mxu0 %v1463
        %1995 = vmatpush.msra.mxu0 %v1459
        %1996 = vmatpush.msra.mxu0 %v1455
        %1997 = vmatpush.msra.mxu0 %v1451
        %1998 = vmatpush.msra.mxu0 %v1447
        %1999 = vmatpush.msra.mxu0 %v1443
        %2000 = vmatpush.msra.mxu0 %v1439
        %2001 = vmatpush.msra.mxu0 %v1435
        %2002 = vmatpush.msra.mxu0 %v1431
        %2003 = vmatpush.msra.mxu0 %v1427
        %2004 = vmatpush.msra.mxu0 %v1423
        %2005 = vmatpush.msra.mxu0 %v1419
        %2006 = vmatpush.msra.mxu0 %v1415
        %2007 = vmatpush.msra.mxu0 %v1411
        %2008 = vmatmul.f32.gmra.mxu0 %v1930
        %v2009 = vpop.f32.mrf.mxu0
        %v2010 = vadd.f32 0.0, %v2009
        %2011 = vdwg.mxu0
        %v2012 = vadd.f32 %v1900, %v1950
        %v2013 = vadd.f32 %v1901, %v1970
        %v2014 = vadd.f32 %v1902, %v1990
        %v2015 = vadd.f32 %v1903, %v2010
        %s2016 = scalar_lea.vmem [#allocation2], 40
        %v2017 = vld [vmem:[%s2016] sm:$0xf]
        %v2019 = vsel %vm536, %v2017, 0
        %2021 = vmatpush.msra.mxu0 0.0
        %2022 = vmatpush.msra.mxu0 0.0
        %2023 = vmatpush.msra.mxu0 0.0
        %2024 = vmatpush.msra.mxu0 0.0
        %2025 = vmatpush.msra.mxu0 0.0
        %2026 = vmatpush.msra.mxu0 0.0
        %2027 = vmatpush.msra.mxu0 0.0
        %2028 = vmatpush.msra.mxu0 0.0
        %2029 = vmatpush.msra.mxu0 0.0
        %2030 = vmatpush.msra.mxu0 0.0
        %2031 = vmatpush.msra.mxu0 0.0
        %2032 = vmatpush.msra.mxu0 0.0
        %2033 = vmatpush.msra.mxu0 0.0
        %2034 = vmatpush.msra.mxu0 0.0
        %2035 = vmatpush.msra.mxu0 0.0
        %2036 = vmatpush.msra.mxu0 %v1910
        %2037 = vmatmul.f32.gmra.mxu0 %v2019
        %v2038 = vpop.f32.mrf.mxu0
        %v2039 = vadd.f32 0.0, %v2038
        %2040 = vdwg.mxu0
        %2041 = vmatpush.msra.mxu0 %v1642
        %2042 = vmatpush.msra.mxu0 %v1638
        %2043 = vmatpush.msra.mxu0 %v1634
        %2044 = vmatpush.msra.mxu0 %v1630
        %2045 = vmatpush.msra.mxu0 %v1626
        %2046 = vmatpush.msra.mxu0 %v1622
        %2047 = vmatpush.msra.mxu0 %v1618
        %2048 = vmatpush.msra.mxu0 %v1614
        %2049 = vmatpush.msra.mxu0 %v1610
        %2050 = vmatpush.msra.mxu0 %v1606
        %2051 = vmatpush.msra.mxu0 %v1602
        %2052 = vmatpush.msra.mxu0 %v1598
        %2053 = vmatpush.msra.mxu0 %v1594
        %2054 = vmatpush.msra.mxu0 %v1590
        %2055 = vmatpush.msra.mxu0 %v1586
        %2056 = vmatpush.msra.mxu0 %v1582
        %2057 = vmatmul.f32.gmra.mxu0 %v2039
        %v2058 = vpop.f32.mrf.mxu0
        %v2059 = vadd.f32 0.0, %v2058
        %2060 = vdwg.mxu0
        %2061 = vmatpush.msra.mxu0 %v1643
        %2062 = vmatpush.msra.mxu0 %v1639
        %2063 = vmatpush.msra.mxu0 %v1635
        %2064 = vmatpush.msra.mxu0 %v1631
        %2065 = vmatpush.msra.mxu0 %v1627
        %2066 = vmatpush.msra.mxu0 %v1623
        %2067 = vmatpush.msra.mxu0 %v1619
        %2068 = vmatpush.msra.mxu0 %v1615
        %2069 = vmatpush.msra.mxu0 %v1611
        %2070 = vmatpush.msra.mxu0 %v1607
        %2071 = vmatpush.msra.mxu0 %v1603
        %2072 = vmatpush.msra.mxu0 %v1599
        %2073 = vmatpush.msra.mxu0 %v1595
        %2074 = vmatpush.msra.mxu0 %v1591
        %2075 = vmatpush.msra.mxu0 %v1587
        %2076 = vmatpush.msra.mxu0 %v1583
        %2077 = vmatmul.f32.gmra.mxu0 %v2039
        %v2078 = vpop.f32.mrf.mxu0
        %v2079 = vadd.f32 0.0, %v2078
        %2080 = vdwg.mxu0
        %2081 = vmatpush.msra.mxu0 %v1644
        %2082 = vmatpush.msra.mxu0 %v1640
        %2083 = vmatpush.msra.mxu0 %v1636
        %2084 = vmatpush.msra.mxu0 %v1632
        %2085 = vmatpush.msra.mxu0 %v1628
        %2086 = vmatpush.msra.mxu0 %v1624
        %2087 = vmatpush.msra.mxu0 %v1620
        %2088 = vmatpush.msra.mxu0 %v1616
        %2089 = vmatpush.msra.mxu0 %v1612
        %2090 = vmatpush.msra.mxu0 %v1608
        %2091 = vmatpush.msra.mxu0 %v1604
        %2092 = vmatpush.msra.mxu0 %v1600
        %2093 = vmatpush.msra.mxu0 %v1596
        %2094 = vmatpush.msra.mxu0 %v1592
        %2095 = vmatpush.msra.mxu0 %v1588
        %2096 = vmatpush.msra.mxu0 %v1584
        %2097 = vmatmul.f32.gmra.mxu0 %v2039
        %v2098 = vpop.f32.mrf.mxu0
        %v2099 = vadd.f32 0.0, %v2098
        %2100 = vdwg.mxu0
        %2101 = vmatpush.msra.mxu0 %v1645
        %2102 = vmatpush.msra.mxu0 %v1641
        %2103 = vmatpush.msra.mxu0 %v1637
        %2104 = vmatpush.msra.mxu0 %v1633
        %2105 = vmatpush.msra.mxu0 %v1629
        %2106 = vmatpush.msra.mxu0 %v1625
        %2107 = vmatpush.msra.mxu0 %v1621
        %2108 = vmatpush.msra.mxu0 %v1617
        %2109 = vmatpush.msra.mxu0 %v1613
        %2110 = vmatpush.msra.mxu0 %v1609
        %2111 = vmatpush.msra.mxu0 %v1605
        %2112 = vmatpush.msra.mxu0 %v1601
        %2113 = vmatpush.msra.mxu0 %v1597
        %2114 = vmatpush.msra.mxu0 %v1593
        %2115 = vmatpush.msra.mxu0 %v1589
        %2116 = vmatpush.msra.mxu0 %v1585
        %2117 = vmatmul.f32.gmra.mxu0 %v2039
        %v2118 = vpop.f32.mrf.mxu0
        %v2119 = vadd.f32 0.0, %v2118
        %2120 = vdwg.mxu0
        %v2121 = vadd.f32 %v2012, %v2059
        %v2122 = vadd.f32 %v2013, %v2079
        %v2123 = vadd.f32 %v2014, %v2099
        %v2124 = vadd.f32 %v2015, %v2119
        %s2125 = scalar_lea.vmem [#allocation2], 44
        %v2126 = vld [vmem:[%s2125] sm:$0xf]
        %v2128 = vsel %vm536, %v2126, 0
        %2130 = vmatpush.msra.mxu0 0.0
        %2131 = vmatpush.msra.mxu0 0.0
        %2132 = vmatpush.msra.mxu0 0.0
        %2133 = vmatpush.msra.mxu0 0.0
        %2134 = vmatpush.msra.mxu0 0.0
        %2135 = vmatpush.msra.mxu0 0.0
        %2136 = vmatpush.msra.mxu0 0.0
        %2137 = vmatpush.msra.mxu0 0.0
        %2138 = vmatpush.msra.mxu0 0.0
        %2139 = vmatpush.msra.mxu0 0.0
        %2140 = vmatpush.msra.mxu0 0.0
        %2141 = vmatpush.msra.mxu0 0.0
        %2142 = vmatpush.msra.mxu0 0.0
        %2143 = vmatpush.msra.mxu0 0.0
        %2144 = vmatpush.msra.mxu0 0.0
        %2145 = vmatpush.msra.mxu0 %v1910
        %2146 = vmatmul.f32.gmra.mxu0 %v2128
        %v2147 = vpop.f32.mrf.mxu0
        %v2148 = vadd.f32 0.0, %v2147
        %2149 = vdwg.mxu0
        %2150 = vmatpush.msra.mxu0 %v1816
        %2151 = vmatpush.msra.mxu0 %v1812
        %2152 = vmatpush.msra.mxu0 %v1808
        %2153 = vmatpush.msra.mxu0 %v1804
        %2154 = vmatpush.msra.mxu0 %v1800
        %2155 = vmatpush.msra.mxu0 %v1796
        %2156 = vmatpush.msra.mxu0 %v1792
        %2157 = vmatpush.msra.mxu0 %v1788
        %2158 = vmatpush.msra.mxu0 %v1784
        %2159 = vmatpush.msra.mxu0 %v1780
        %2160 = vmatpush.msra.mxu0 %v1776
        %2161 = vmatpush.msra.mxu0 %v1772
        %2162 = vmatpush.msra.mxu0 %v1768
        %2163 = vmatpush.msra.mxu0 %v1764
        %2164 = vmatpush.msra.mxu0 %v1760
        %2165 = vmatpush.msra.mxu0 %v1756
        %2166 = vmatmul.f32.gmra.mxu0 %v2148
        %v2167 = vpop.f32.mrf.mxu0
        %v2168 = vadd.f32 0.0, %v2167
        %2169 = vdwg.mxu0
        %2170 = vmatpush.msra.mxu0 %v1817
        %2171 = vmatpush.msra.mxu0 %v1813
        %2172 = vmatpush.msra.mxu0 %v1809
        %2173 = vmatpush.msra.mxu0 %v1805
        %2174 = vmatpush.msra.mxu0 %v1801
        %2175 = vmatpush.msra.mxu0 %v1797
        %2176 = vmatpush.msra.mxu0 %v1793
        %2177 = vmatpush.msra.mxu0 %v1789
        %2178 = vmatpush.msra.mxu0 %v1785
        %2179 = vmatpush.msra.mxu0 %v1781
        %2180 = vmatpush.msra.mxu0 %v1777
        %2181 = vmatpush.msra.mxu0 %v1773
        %2182 = vmatpush.msra.mxu0 %v1769
        %2183 = vmatpush.msra.mxu0 %v1765
        %2184 = vmatpush.msra.mxu0 %v1761
        %2185 = vmatpush.msra.mxu0 %v1757
        %2186 = vmatmul.f32.gmra.mxu0 %v2148
        %v2187 = vpop.f32.mrf.mxu0
        %v2188 = vadd.f32 0.0, %v2187
        %2189 = vdwg.mxu0
        %2190 = vmatpush.msra.mxu0 %v1818
        %2191 = vmatpush.msra.mxu0 %v1814
        %2192 = vmatpush.msra.mxu0 %v1810
        %2193 = vmatpush.msra.mxu0 %v1806
        %2194 = vmatpush.msra.mxu0 %v1802
        %2195 = vmatpush.msra.mxu0 %v1798
        %2196 = vmatpush.msra.mxu0 %v1794
        %2197 = vmatpush.msra.mxu0 %v1790
        %2198 = vmatpush.msra.mxu0 %v1786
        %2199 = vmatpush.msra.mxu0 %v1782
        %2200 = vmatpush.msra.mxu0 %v1778
        %2201 = vmatpush.msra.mxu0 %v1774
        %2202 = vmatpush.msra.mxu0 %v1770
        %2203 = vmatpush.msra.mxu0 %v1766
        %2204 = vmatpush.msra.mxu0 %v1762
        %2205 = vmatpush.msra.mxu0 %v1758
        %2206 = vmatmul.f32.gmra.mxu0 %v2148
        %v2207 = vpop.f32.mrf.mxu0
        %v2208 = vadd.f32 0.0, %v2207
        %2209 = vdwg.mxu0
        %2210 = vmatpush.msra.mxu0 %v1819
        %2211 = vmatpush.msra.mxu0 %v1815
        %2212 = vmatpush.msra.mxu0 %v1811
        %2213 = vmatpush.msra.mxu0 %v1807
        %2214 = vmatpush.msra.mxu0 %v1803
        %2215 = vmatpush.msra.mxu0 %v1799
        %2216 = vmatpush.msra.mxu0 %v1795
        %2217 = vmatpush.msra.mxu0 %v1791
        %2218 = vmatpush.msra.mxu0 %v1787
        %2219 = vmatpush.msra.mxu0 %v1783
        %2220 = vmatpush.msra.mxu0 %v1779
        %2221 = vmatpush.msra.mxu0 %v1775
        %2222 = vmatpush.msra.mxu0 %v1771
        %2223 = vmatpush.msra.mxu0 %v1767
        %2224 = vmatpush.msra.mxu0 %v1763
        %2225 = vmatpush.msra.mxu0 %v1759
        %2226 = vmatmul.f32.gmra.mxu0 %v2148
        %v2227 = vpop.f32.mrf.mxu0
        %v2228 = vadd.f32 0.0, %v2227
        %2229 = vdwg.mxu0
        %v2230 = vadd.f32 %v2121, %v2168
        %v2231 = vadd.f32 %v2122, %v2188
        %v2232 = vadd.f32 %v2123, %v2208
        %v2233 = vadd.f32 %v2124, %v2228
        %v2234 = vld [vmem:[%s276] sm:$0xf]
        %2236 = vset.pattern.permute.xlu0 0
        %2237 = vperm.xlu0 %2236, %v2234
        %v2238 = vpop.permute.xlu0 %2237
        %v2240 = vadd.f32 %v2230, %v2238
        %v2241 = vadd.f32 %v2231, %v2238
        %v2242 = vadd.f32 %v2232, %v2238
        %v2243 = vadd.f32 %v2233, %v2238
        %v2248 = vrot.slane %v2241, 4
        %v2249 = vrot.slane %v2243, 4
        %v2250 = vsel %vm540, %v2240, %v2248
        %v2251 = vsel %vm540, %v2242, %v2249
        %2254 = vst [vmem:[%s267] sm:$0xff] %v2250
        %2255 = vst [vmem:[%s267 + $0x8] sm:$0xff] %v2251
        %s2256 = sand.u32 %s150, 1
        %s2257 = scalar_lea.sflag [#allocation4], %s2256
        %s2258 = sand.u32 %s150, 1
        %s2259 = smul.addr %s2258, 16
        %s2260 = scalar_lea.vmem [#allocation7], %s2259
        // Predicated region
        $region45: #{tpu_custom_call.1} parent=35 // pred_check
          %p2261 = pneg %p160
        $region46: #{tpu_custom_call.1} parent=35 // pred_check_branch
          %2263 = sbr.rel (%p2261) target = $region48
        $region47: #{tpu_custom_call.1} parent=35 // pred_region
          %s2264 = smul.u32 4, %s27
          %2266 = vsyncadd %s2257, 0
          %s2267 = smul.addr %s26, 8
          %s2268 = sadd.s32 %s2264, %s2267
          %s2269 = smul.addr %s25, 8
          %s2270 = sadd.s32 %s2268, %s2269
          %s2271 = smul.addr %s2270, 4
          %s2272 = scalar_lea.hbm %s4, %s2271
          %s2274 = sshll.u32 %s2260, 4
          %s2275 = int_to_ptr.vmem [resolvable:$true] %s2274
          %s2276 = sshll.u32 %s2272, 4
          %s2277 = int_to_ptr.hbm [resolvable:$true] %s2276
          %2279 = dma.vmem_to_hbm [thread:$0]  %s2275, 256, %s2277, %s2257
        $region48: #{tpu_custom_call.1} parent=35 // pred_fallthru
          _
      $region36: #{tpu_custom_call.1} parent=5 // pred_fallthru
        _
      %p2280 = scmp.le.s32.totalorder 2, %s15
      // Predicated region
      $region49: #{tpu_custom_call.1} parent=5 // pred_check
        %p2281 = pneg %p2280
      $region50: #{tpu_custom_call.1} parent=5 // pred_check_branch
        %2283 = sbr.rel (%p2281) target = $region52
      $region51: #{tpu_custom_call.1} parent=5 // pred_region
        %s2284 = ssub.s32 %s15, 2
        // Predicated region
        $region53: #{tpu_custom_call.1} parent=51 // pred_check
          %p2285 = pneg %p166
        $region54: #{tpu_custom_call.1} parent=51 // pred_check_branch
          %2287 = sbr.rel (%p2285) target = $region56
        $region55: #{tpu_custom_call.1} parent=51 // pred_region
          %s2288 = sand.u32 %s151, 1
          %s2289 = scalar_lea.sflag [#allocation4], %s2288
          %s2290 = sand.u32 %s151, 1
          %s2291 = smul.addr %s2290, 16
          %s2292 = scalar_lea.vmem [#allocation7], %s2291
          %2294 = dma.done %s2289, 256
        $region56: #{tpu_custom_call.1} parent=51 // pred_fallthru
          _
      $region52: #{tpu_custom_call.1} parent=5 // pred_fallthru
        _
    $region6: #{tpu_custom_call.1} parent=1 // loop_footer
      %s19 = sadd.s32 1, %s15
    $region7: #{tpu_custom_call.1} parent=1 // loop_footer_branch
      %14 = sbr.rel target = $region3
    $region8: #{tpu_custom_call.1} parent=1 // loop_exit
      _
    %2295 = vsyncpa [#allocation3], 1
    %s2296 = scalar_lea.sflag [#allocation3], 1
    %2297 = vsyncpa %s2296, 1
    %2298 = vsyncpa [#allocation6], 1
    %2299 = vsyncpa [#allocation4], 1
    %s2300 = scalar_lea.sflag [#allocation4], 1
    %2301 = vsyncpa %s2300, 1

</llo_original>
